<compile_context>
chip_gen: v7x
topology: tpu7x:2x2x1
jax: 0.10.0
libtpu: 0.0.40
codegen_flags: <defaults>
</compile_context>

<pallas_src>
import math
import functools

import numpy as np
import jax
import jax.numpy as jnp
from jax.experimental import pallas as pl
from jax.experimental.pallas import tpu as pltpu


def _gelu(x):
    # Exactly the module's tanh-approx GeLU.
    return 0.5 * x * (1.0 + jnp.tanh(x * 0.7978845608 * (1.0 + 0.044715 * x * x)))


def _round_up(x, m):
    return (x + m - 1) // m * m


def _shift_rows(x, off):
    """y[i] = x[i + off]; rows falling outside [0, L) are zero (same-pad conv)."""
    L, C = x.shape
    if off == 0:
        return x
    if abs(off) >= L:
        return jnp.zeros_like(x)
    z = jnp.zeros((abs(off), C), x.dtype)
    if off > 0:
        return jnp.concatenate([x[off:, :], z], axis=0)
    return jnp.concatenate([z, x[:off, :]], axis=0)


# -----------------------------------------------------------------------------
# Pallas kernel: masked input -> k-tap conv (in-VMEM taps) -> bias -> GeLU.
# -----------------------------------------------------------------------------
def _conv_gelu_kernel(x_ref, m_ref, w_ref, b_ref, o_ref, *, kmax):
    """One conv layer for one batch element, whole sequence resident in VMEM.

    x_ref: (1, L, Cin_pad)              input tile (compute dtype)
    m_ref: (1, L, 1)                    0/1 sequence mask (compute dtype)
    w_ref: (kmax, Cin_pad, Cout_pad)    fused tap weights (compute dtype)
    b_ref: (1, Cout_pad)                bias (f32)
    o_ref: (1, L, Cout_pad)             lane-dense output tile
    """
    pad = (kmax - 1) // 2
    x = x_ref[0] * m_ref[0]          # == x.masked_fill_(~mask, 0) before the conv
    # Centre tap first, then the shifted taps; accumulate in f32.
    acc = jnp.dot(x, w_ref[pad], preferred_element_type=jnp.float32)
    for t in range(kmax):
        if t == pad:
            continue
        xt = _shift_rows(x, t - pad)                 # row i holds x[i + t - pad]
        acc = acc + jnp.dot(xt, w_ref[t], preferred_element_type=jnp.float32)
    acc = acc + b_ref[...]                           # (1, Cout_pad) broadcasts (f32)
    o_ref[0] = _gelu(acc).astype(o_ref.dtype)        # GeLU in f32, lane-dense store


def conv_gelu_layer(h, m, bank, *, compute_dtype=jnp.float32, out_dtype=None):
    """h: (N, L, Cin_pad) -> (N, L, Cout_pad); one pallas_call, grid over batch."""
    n, L, cin_pad = h.shape
    assert cin_pad == bank["cin_pad"], (cin_pad, bank["cin_pad"])
    kmax = bank["kmax"]
    cout_pad = bank["cout_pad"]
    out_dtype = compute_dtype if out_dtype is None else out_dtype
    w = bank["w"].astype(compute_dtype)
    b = bank["b"]                                    # f32 bias row (added to f32 acc)
    kernel = functools.partial(_conv_gelu_kernel, kmax=kmax)
    # TODO(synk): for sequences too long to keep resident in VMEM, add an L-tiled
    # grid axis with halo'd blocks; not needed at these sizes.
    return pl.pallas_call(
        kernel,
        out_shape=jax.ShapeDtypeStruct((n, L, cout_pad), out_dtype),
        grid_spec=pltpu.PrefetchScalarGridSpec(
            num_scalar_prefetch=0,
            grid=(n,),
            in_specs=[
                pl.BlockSpec((1, L, cin_pad), lambda i: (i, 0, 0)),   # one sequence / step
                pl.BlockSpec((1, L, 1), lambda i: (i, 0, 0)),         # its mask
                # Weights / bias stay resident across the grid (constant index_map).
                pl.BlockSpec((kmax, cin_pad, cout_pad), lambda i: (0, 0, 0)),
                pl.BlockSpec((1, cout_pad), lambda i: (0, 0)),
            ],
            out_specs=pl.BlockSpec((1, L, cout_pad), lambda i: (i, 0, 0)),
        ),
        compiler_params=pltpu.CompilerParams(
            dimension_semantics=("parallel",),     # batch steps shard across TCs (v7x)
            vmem_limit_bytes=32 * 1024 * 1024,     # explicit budget, fits v7x's 64 MiB
        ),
    )(h, m, w, b)


# -----------------------------------------------------------------------------
# Encoder forward (eval mode): 3 fused mask->conv->GeLU layers, NLC throughout.
# -----------------------------------------------------------------------------
def encoder_forward(x, mask, banks, *, compute_dtype=jnp.float32):
    """x: (N, L, C_in); mask: (N, L, 1) bool.  Returns (N, L, hidden) float32.

    The torch module's transpose(1,2) in/out cancels against doing the conv
    channel-last, so we stay in NLC.  The mask multiply is fused into each
    layer's kernel; the final output is not masked (matches the module).
    """
    # TODO(synk): dropout(p=0.2) omitted -- eval/inference forward (identity);
    # training-mode stochastic dropout is not implemented.
    n, L, cin = x.shape
    h = x.astype(compute_dtype)
    cin_pad0 = banks[0]["cin_pad"]
    if cin_pad0 != cin:                       # one tiny pad of the raw input only
        h = jnp.pad(h, ((0, 0), (0, 0), (0, cin_pad0 - cin)))
    m = mask.astype(compute_dtype)            # 0/1; multiplied in-kernel == masked_fill
    for bank in banks:
        h = conv_gelu_layer(h, m, bank, compute_dtype=compute_dtype)
    return h[..., : banks[-1]["cout"]].astype(jnp.float32)


# -----------------------------------------------------------------------------
# Parameter init mirroring the PyTorch __init__ (weight_norm reparam explicit).
# -----------------------------------------------------------------------------
def init_conv1d_branches(key, in_channels, out_channels, kernel_sizes):
    assert all(k % 2 == 1 for k in kernel_sizes)
    assert out_channels % len(kernel_sizes) == 0
    cout = out_channels // len(kernel_sizes)
    branches = []
    for k in kernel_sizes:
        key, sub = jax.random.split(key)
        std = math.sqrt(2.0 / (in_channels * k))
        v = jax.random.normal(sub, (cout, in_channels, k), jnp.float32) * std
        norm = jnp.sqrt(jnp.sum(v * v, axis=(1, 2), keepdims=True))
        g = norm                                    # weight_norm(dim=0): g init = ||v||
        w_eff = g * v / jnp.maximum(norm, 1e-12)    # effective weight (== v at init)
        bias = jnp.zeros((cout,), jnp.float32)
        branches.append((k, w_eff, bias))
    return branches


def build_bank(branches, in_channels, *, lane=128):
    """Fuse all branches of one Conv1d into padded tap weights.

    Returns w: (kmax, Cin_pad, Cout_pad), b: (1, Cout_pad).  Real weights sit in
    rows [:Cin] and columns [:nb*Cout'] (branch-major); the zero padding keeps
    the output lane-dense (multiple of 128 columns) and makes padded input
    channels of the previous layer contribute nothing.
    """
    kmax = max(k for k, _, _ in branches)
    pad_max = (kmax - 1) // 2
    coutp = branches[0][1].shape[0]
    cout = len(branches) * coutp
    cin_pad = _round_up(max(in_channels, lane), lane)
    cout_pad = _round_up(max(cout, lane), lane)
    w = np.zeros((kmax, cin_pad, cout_pad), np.float32)
    b = np.zeros((1, cout_pad), np.float32)
    for bi, (k, w_oik, bias) in enumerate(branches):
        off = pad_max - (k - 1) // 2            # centre-align this branch inside kmax taps
        c0 = bi * coutp
        w_np = np.asarray(w_oik)
        for t in range(k):
            w[off + t, :in_channels, c0:c0 + coutp] = w_np[:, :, t].T
        b[0, c0:c0 + coutp] = np.asarray(bias)
    return {"kmax": kmax, "cin": in_channels, "cout": cout,
            "cin_pad": cin_pad, "cout_pad": cout_pad,
            "w": jnp.asarray(w), "b": jnp.asarray(b)}


# -----------------------------------------------------------------------------
# Pure-JAX reference for the correctness check.
# -----------------------------------------------------------------------------
def _conv_branch_ref(x_ncl, k, w_oik, bias):
    pad = (k - 1) // 2
    y = jax.lax.conv_general_dilated(
        x_ncl, w_oik, window_strides=(1,), padding=[(pad, pad)],
        dimension_numbers=("NCH", "OIH", "NCH"))
    return _gelu(y + bias[None, :, None])


def _encoder_reference(x_nlc, mask_nl1, layers_raw):
    h = jnp.transpose(x_nlc, (0, 2, 1))          # NCL
    m = jnp.transpose(mask_nl1, (0, 2, 1))       # (N, 1, L)
    for branches in layers_raw:
        h = jnp.where(m, h, 0.0)
        h = jnp.concatenate([_conv_branch_ref(h, k, w, b) for k, w, b in branches], axis=-1)
    return jnp.transpose(h, (0, 2, 1))           # back to (N, L, C)


# -----------------------------------------------------------------------------
if __name__ == "__main__":
    key = jax.random.PRNGKey(0)
    k_x, k_p = jax.random.split(key)

    # Small test shapes; hidden_size=150 is fixed by the module spec.
    batch, seq_len, input_size = 2, 16, 32
    hidden_size, num_layers = 150, 3

    x = jax.random.normal(k_x, (batch, seq_len, input_size), jnp.float32)
    lens = jnp.array([seq_len, seq_len - 5], jnp.int32)
    mask = (jnp.arange(seq_len)[None, :] < lens[:, None])[..., None]   # (N, L, 1) bool

    layers_raw, banks = [], []
    cin = input_size
    kp = k_p
    for _ in range(num_layers):
        kp, sub = jax.random.split(kp)
        branches = init_conv1d_branches(sub, cin, hidden_size, (3,))
        layers_raw.append(branches)
        banks.append(build_bank(branches, cin))
        cin = hidden_size

    fwd = jax.jit(lambda xx, mm: encoder_forward(xx, mm, banks))
    out = jax.block_until_ready(fwd(x, mask))
    ref = jax.block_until_ready(_encoder_reference(x, mask, layers_raw))
    assert out.shape == (batch, seq_len, hidden_size), out.shape
    err = float(np.max(np.abs(np.asarray(out) - np.asarray(ref))))
    assert np.allclose(np.asarray(out), np.asarray(ref), atol=1e-4, rtol=1e-4), err

    print("KERNEL_OK")
</pallas_src>

<mosaic_0001>
module attributes {stable_mosaic.version = 11 : i64} {
  func.func @_conv_gelu_kernel(%arg0: i32, %arg1: memref<1x16x128xf32, #tpu.memory_space<vmem>>, %arg2: memref<1x16x1xf32, #tpu.memory_space<vmem>>, %arg3: memref<3x128x256xf32, #tpu.memory_space<vmem>>, %arg4: memref<1x256xf32, #tpu.memory_space<vmem>>, %arg5: memref<1x16x256xf32, #tpu.memory_space<vmem>>) attributes {dimension_semantics = [#tpu.dimension_semantics<parallel>], iteration_bounds = array<i64: 2>, scalar_prefetch = 0 : i64, scratch_operands = 0 : i64, tpu.core_type = #tpu.core_type<tc>, window_params = [{transform_indices = @transform_0, window_bounds = array<i64: 1, 16, 128>}, {transform_indices = @transform_1, window_bounds = array<i64: 1, 16, 1>}, {pipeline_mode = #tpu.pipeline_mode<synchronous>, transform_indices = @transform_2, window_bounds = array<i64: 3, 128, 256>}, {pipeline_mode = #tpu.pipeline_mode<synchronous>, transform_indices = @transform_3, window_bounds = array<i64: 1, 256>}, {transform_indices = @transform_4, window_bounds = array<i64: 1, 16, 256>}]} {
    %c0 = arith.constant 0 : index
    %c0_0 = arith.constant 0 : index
    %c0_1 = arith.constant 0 : index
    %0 = vector.load %arg1[%c0, %c0_0, %c0_1] : memref<1x16x128xf32, #tpu.memory_space<vmem>>, vector<1x16x128xf32>
    %1 = vector.shape_cast %0 : vector<1x16x128xf32> to vector<16x128xf32>
    %c0_2 = arith.constant 0 : index
    %c0_3 = arith.constant 0 : index
    %c0_4 = arith.constant 0 : index
    %2 = vector.load %arg2[%c0_2, %c0_3, %c0_4] : memref<1x16x1xf32, #tpu.memory_space<vmem>>, vector<1x16x1xf32>
    %3 = vector.shape_cast %2 : vector<1x16x1xf32> to vector<16x1xf32>
    %4 = vector.broadcast %3 : vector<16x1xf32> to vector<16x128xf32>
    %5 = arith.mulf %1, %4 : vector<16x128xf32>
    %c1 = arith.constant 1 : index
    %c0_5 = arith.constant 0 : index
    %c0_6 = arith.constant 0 : index
    %6 = vector.load %arg3[%c1, %c0_5, %c0_6] : memref<3x128x256xf32, #tpu.memory_space<vmem>>, vector<1x128x256xf32>
    %7 = vector.shape_cast %6 : vector<1x128x256xf32> to vector<128x256xf32>
    %cst = arith.constant dense<0.000000e+00> : vector<16x256xf32>
    %8 = tpu.matmul %5, %7, %cst {dimension_numbers = #tpu.dot_dimension_numbers<[1], [0], [0], [1], [0, 0, 1, 1], [], []>} : vector<16x128xf32>, vector<128x256xf32>, vector<16x256xf32> -> vector<16x256xf32>
    %cst_7 = arith.constant 0.000000e+00 : f32
    %9 = vector.broadcast %cst_7 : f32 to vector<1x128xf32>
    %10 = vector.extract_strided_slice %5 {offsets = [0, 0], sizes = [15, 128], strides = [1, 1]} : vector<16x128xf32> to vector<15x128xf32>
    %11 = tpu.concatenate %9, %10 in 0 : vector<1x128xf32>, vector<15x128xf32> -> vector<16x128xf32>
    %c0_8 = arith.constant 0 : index
    %c0_9 = arith.constant 0 : index
    %c0_10 = arith.constant 0 : index
    %12 = vector.load %arg3[%c0_8, %c0_9, %c0_10] : memref<3x128x256xf32, #tpu.memory_space<vmem>>, vector<1x128x256xf32>
    %13 = vector.shape_cast %12 : vector<1x128x256xf32> to vector<128x256xf32>
    %cst_11 = arith.constant dense<0.000000e+00> : vector<16x256xf32>
    %14 = tpu.matmul %11, %13, %cst_11 {dimension_numbers = #tpu.dot_dimension_numbers<[1], [0], [0], [1], [0, 0, 1, 1], [], []>} : vector<16x128xf32>, vector<128x256xf32>, vector<16x256xf32> -> vector<16x256xf32>
    %15 = arith.addf %8, %14 : vector<16x256xf32>
    %cst_12 = arith.constant 0.000000e+00 : f32
    %16 = vector.broadcast %cst_12 : f32 to vector<1x128xf32>
    %17 = vector.extract_strided_slice %5 {offsets = [1, 0], sizes = [15, 128], strides = [1, 1]} : vector<16x128xf32> to vector<15x128xf32>
    %18 = tpu.concatenate %17, %16 in 0 : vector<15x128xf32>, vector<1x128xf32> -> vector<16x128xf32>
    %c2 = arith.constant 2 : index
    %c0_13 = arith.constant 0 : index
    %c0_14 = arith.constant 0 : index
    %19 = vector.load %arg3[%c2, %c0_13, %c0_14] : memref<3x128x256xf32, #tpu.memory_space<vmem>>, vector<1x128x256xf32>
    %20 = vector.shape_cast %19 : vector<1x128x256xf32> to vector<128x256xf32>
    %cst_15 = arith.constant dense<0.000000e+00> : vector<16x256xf32>
    %21 = tpu.matmul %18, %20, %cst_15 {dimension_numbers = #tpu.dot_dimension_numbers<[1], [0], [0], [1], [0, 0, 1, 1], [], []>} : vector<16x128xf32>, vector<128x256xf32>, vector<16x256xf32> -> vector<16x256xf32>
    %22 = arith.addf %15, %21 : vector<16x256xf32>
    %c0_16 = arith.constant 0 : index
    %c0_17 = arith.constant 0 : index
    %23 = vector.load %arg4[%c0_16, %c0_17] : memref<1x256xf32, #tpu.memory_space<vmem>>, vector<1x256xf32>
    %24 = vector.broadcast %23 : vector<1x256xf32> to vector<16x256xf32>
    %25 = arith.addf %22, %24 : vector<16x256xf32>
    %cst_18 = arith.constant 5.000000e-01 : f32
    %26 = vector.broadcast %cst_18 : f32 to vector<16x256xf32>
    %27 = arith.mulf %26, %25 : vector<16x256xf32>
    %cst_19 = arith.constant 0.797884583 : f32
    %28 = vector.broadcast %cst_19 : f32 to vector<16x256xf32>
    %29 = arith.mulf %25, %28 : vector<16x256xf32>
    %cst_20 = arith.constant 4.471500e-02 : f32
    %30 = vector.broadcast %cst_20 : f32 to vector<16x256xf32>
    %31 = arith.mulf %30, %25 : vector<16x256xf32>
    %32 = arith.mulf %31, %25 : vector<16x256xf32>
    %cst_21 = arith.constant 1.000000e+00 : f32
    %33 = vector.broadcast %cst_21 : f32 to vector<16x256xf32>
    %34 = arith.addf %33, %32 : vector<16x256xf32>
    %35 = arith.mulf %29, %34 : vector<16x256xf32>
    %36 = math.tanh %35 : vector<16x256xf32>
    %cst_22 = arith.constant 1.000000e+00 : f32
    %37 = vector.broadcast %cst_22 : f32 to vector<16x256xf32>
    %38 = arith.addf %37, %36 : vector<16x256xf32>
    %39 = arith.mulf %27, %38 : vector<16x256xf32>
    %c0_23 = arith.constant 0 : index
    %c0_24 = arith.constant 0 : index
    %c0_25 = arith.constant 0 : index
    %40 = vector.load %arg5[%c0_23, %c0_24, %c0_25] : memref<1x16x256xf32, #tpu.memory_space<vmem>>, vector<1x16x256xf32>
    %41 = vector.shape_cast %40 : vector<1x16x256xf32> to vector<16x256xf32>
    %42 = vector.shape_cast %39 : vector<16x256xf32> to vector<1x16x256xf32>
    tpu.vector_store %arg5[%c0_23, %c0_24, %c0_25], %42 {strides = array<i32>} : memref<1x16x256xf32, #tpu.memory_space<vmem>>, vector<1x16x256xf32>,
    return
  }
  func.func @transform_0(%arg0: i32) -> (i32, i32, i32) {
    %c0_i32 = arith.constant 0 : i32
    %c0_i32_0 = arith.constant 0 : i32
    %c0_i32_1 = arith.constant 0 : i32
    return %arg0, %c0_i32, %c0_i32_0 : i32, i32, i32
  }
  func.func @transform_1(%arg0: i32) -> (i32, i32, i32) {
    %c0_i32 = arith.constant 0 : i32
    %c0_i32_0 = arith.constant 0 : i32
    %c0_i32_1 = arith.constant 0 : i32
    return %arg0, %c0_i32, %c0_i32_0 : i32, i32, i32
  }
  func.func @transform_2(%arg0: i32) -> (i32, i32, i32) {
    %c0_i32 = arith.constant 0 : i32
    %c0_i32_0 = arith.constant 0 : i32
    %c0_i32_1 = arith.constant 0 : i32
    %c0_i32_2 = arith.constant 0 : i32
    return %c0_i32, %c0_i32_0, %c0_i32_1 : i32, i32, i32
  }
  func.func @transform_3(%arg0: i32) -> (i32, i32) {
    %c0_i32 = arith.constant 0 : i32
    %c0_i32_0 = arith.constant 0 : i32
    %c0_i32_1 = arith.constant 0 : i32
    return %c0_i32, %c0_i32_0 : i32, i32
  }
  func.func @transform_4(%arg0: i32) -> (i32, i32, i32) {
    %c0_i32 = arith.constant 0 : i32
    %c0_i32_0 = arith.constant 0 : i32
    %c0_i32_1 = arith.constant 0 : i32
    return %arg0, %c0_i32, %c0_i32_0 : i32, i32, i32
  }
}

module attributes {stable_mosaic.version = 11 : i64} {
  func.func @_conv_gelu_kernel(%arg0: i32, %arg1: memref<1x16x256xf32, #tpu.memory_space<vmem>>, %arg2: memref<1x16x1xf32, #tpu.memory_space<vmem>>, %arg3: memref<3x256x256xf32, #tpu.memory_space<vmem>>, %arg4: memref<1x256xf32, #tpu.memory_space<vmem>>, %arg5: memref<1x16x256xf32, #tpu.memory_space<vmem>>) attributes {dimension_semantics = [#tpu.dimension_semantics<parallel>], iteration_bounds = array<i64: 2>, scalar_prefetch = 0 : i64, scratch_operands = 0 : i64, tpu.core_type = #tpu.core_type<tc>, window_params = [{transform_indices = @transform_0, window_bounds = array<i64: 1, 16, 256>}, {transform_indices = @transform_1, window_bounds = array<i64: 1, 16, 1>}, {pipeline_mode = #tpu.pipeline_mode<synchronous>, transform_indices = @transform_2, window_bounds = array<i64: 3, 256, 256>}, {pipeline_mode = #tpu.pipeline_mode<synchronous>, transform_indices = @transform_3, window_bounds = array<i64: 1, 256>}, {transform_indices = @transform_4, window_bounds = array<i64: 1, 16, 256>}]} {
    %c0 = arith.constant 0 : index
    %c0_0 = arith.constant 0 : index
    %c0_1 = arith.constant 0 : index
    %0 = vector.load %arg1[%c0, %c0_0, %c0_1] : memref<1x16x256xf32, #tpu.memory_space<vmem>>, vector<1x16x256xf32>
    %1 = vector.shape_cast %0 : vector<1x16x256xf32> to vector<16x256xf32>
    %c0_2 = arith.constant 0 : index
    %c0_3 = arith.constant 0 : index
    %c0_4 = arith.constant 0 : index
    %2 = vector.load %arg2[%c0_2, %c0_3, %c0_4] : memref<1x16x1xf32, #tpu.memory_space<vmem>>, vector<1x16x1xf32>
    %3 = vector.shape_cast %2 : vector<1x16x1xf32> to vector<16x1xf32>
    %4 = vector.broadcast %3 : vector<16x1xf32> to vector<16x256xf32>
    %5 = arith.mulf %1, %4 : vector<16x256xf32>
    %c1 = arith.constant 1 : index
    %c0_5 = arith.constant 0 : index
    %c0_6 = arith.constant 0 : index
    %6 = vector.load %arg3[%c1, %c0_5, %c0_6] : memref<3x256x256xf32, #tpu.memory_space<vmem>>, vector<1x256x256xf32>
    %7 = vector.shape_cast %6 : vector<1x256x256xf32> to vector<256x256xf32>
    %cst = arith.constant dense<0.000000e+00> : vector<16x256xf32>
    %8 = tpu.matmul %5, %7, %cst {dimension_numbers = #tpu.dot_dimension_numbers<[1], [0], [0], [1], [0, 0, 1, 1], [], []>} : vector<16x256xf32>, vector<256x256xf32>, vector<16x256xf32> -> vector<16x256xf32>
    %cst_7 = arith.constant 0.000000e+00 : f32
    %9 = vector.broadcast %cst_7 : f32 to vector<1x256xf32>
    %10 = vector.extract_strided_slice %5 {offsets = [0, 0], sizes = [15, 256], strides = [1, 1]} : vector<16x256xf32> to vector<15x256xf32>
    %11 = tpu.concatenate %9, %10 in 0 : vector<1x256xf32>, vector<15x256xf32> -> vector<16x256xf32>
    %c0_8 = arith.constant 0 : index
    %c0_9 = arith.constant 0 : index
    %c0_10 = arith.constant 0 : index
    %12 = vector.load %arg3[%c0_8, %c0_9, %c0_10] : memref<3x256x256xf32, #tpu.memory_space<vmem>>, vector<1x256x256xf32>
    %13 = vector.shape_cast %12 : vector<1x256x256xf32> to vector<256x256xf32>
    %cst_11 = arith.constant dense<0.000000e+00> : vector<16x256xf32>
    %14 = tpu.matmul %11, %13, %cst_11 {dimension_numbers = #tpu.dot_dimension_numbers<[1], [0], [0], [1], [0, 0, 1, 1], [], []>} : vector<16x256xf32>, vector<256x256xf32>, vector<16x256xf32> -> vector<16x256xf32>
    %15 = arith.addf %8, %14 : vector<16x256xf32>
    %cst_12 = arith.constant 0.000000e+00 : f32
    %16 = vector.broadcast %cst_12 : f32 to vector<1x256xf32>
    %17 = vector.extract_strided_slice %5 {offsets = [1, 0], sizes = [15, 256], strides = [1, 1]} : vector<16x256xf32> to vector<15x256xf32>
    %18 = tpu.concatenate %17, %16 in 0 : vector<15x256xf32>, vector<1x256xf32> -> vector<16x256xf32>
    %c2 = arith.constant 2 : index
    %c0_13 = arith.constant 0 : index
    %c0_14 = arith.constant 0 : index
    %19 = vector.load %arg3[%c2, %c0_13, %c0_14] : memref<3x256x256xf32, #tpu.memory_space<vmem>>, vector<1x256x256xf32>
    %20 = vector.shape_cast %19 : vector<1x256x256xf32> to vector<256x256xf32>
    %cst_15 = arith.constant dense<0.000000e+00> : vector<16x256xf32>
    %21 = tpu.matmul %18, %20, %cst_15 {dimension_numbers = #tpu.dot_dimension_numbers<[1], [0], [0], [1], [0, 0, 1, 1], [], []>} : vector<16x256xf32>, vector<256x256xf32>, vector<16x256xf32> -> vector<16x256xf32>
    %22 = arith.addf %15, %21 : vector<16x256xf32>
    %c0_16 = arith.constant 0 : index
    %c0_17 = arith.constant 0 : index
    %23 = vector.load %arg4[%c0_16, %c0_17] : memref<1x256xf32, #tpu.memory_space<vmem>>, vector<1x256xf32>
    %24 = vector.broadcast %23 : vector<1x256xf32> to vector<16x256xf32>
    %25 = arith.addf %22, %24 : vector<16x256xf32>
    %cst_18 = arith.constant 5.000000e-01 : f32
    %26 = vector.broadcast %cst_18 : f32 to vector<16x256xf32>
    %27 = arith.mulf %26, %25 : vector<16x256xf32>
    %cst_19 = arith.constant 0.797884583 : f32
    %28 = vector.broadcast %cst_19 : f32 to vector<16x256xf32>
    %29 = arith.mulf %25, %28 : vector<16x256xf32>
    %cst_20 = arith.constant 4.471500e-02 : f32
    %30 = vector.broadcast %cst_20 : f32 to vector<16x256xf32>
    %31 = arith.mulf %30, %25 : vector<16x256xf32>
    %32 = arith.mulf %31, %25 : vector<16x256xf32>
    %cst_21 = arith.constant 1.000000e+00 : f32
    %33 = vector.broadcast %cst_21 : f32 to vector<16x256xf32>
    %34 = arith.addf %33, %32 : vector<16x256xf32>
    %35 = arith.mulf %29, %34 : vector<16x256xf32>
    %36 = math.tanh %35 : vector<16x256xf32>
    %cst_22 = arith.constant 1.000000e+00 : f32
    %37 = vector.broadcast %cst_22 : f32 to vector<16x256xf32>
    %38 = arith.addf %37, %36 : vector<16x256xf32>
    %39 = arith.mulf %27, %38 : vector<16x256xf32>
    %c0_23 = arith.constant 0 : index
    %c0_24 = arith.constant 0 : index
    %c0_25 = arith.constant 0 : index
    %40 = vector.load %arg5[%c0_23, %c0_24, %c0_25] : memref<1x16x256xf32, #tpu.memory_space<vmem>>, vector<1x16x256xf32>
    %41 = vector.shape_cast %40 : vector<1x16x256xf32> to vector<16x256xf32>
    %42 = vector.shape_cast %39 : vector<16x256xf32> to vector<1x16x256xf32>
    tpu.vector_store %arg5[%c0_23, %c0_24, %c0_25], %42 {strides = array<i32>} : memref<1x16x256xf32, #tpu.memory_space<vmem>>, vector<1x16x256xf32>,
    return
  }
  func.func @transform_0(%arg0: i32) -> (i32, i32, i32) {
    %c0_i32 = arith.constant 0 : i32
    %c0_i32_0 = arith.constant 0 : i32
    %c0_i32_1 = arith.constant 0 : i32
    return %arg0, %c0_i32, %c0_i32_0 : i32, i32, i32
  }
  func.func @transform_1(%arg0: i32) -> (i32, i32, i32) {
    %c0_i32 = arith.constant 0 : i32
    %c0_i32_0 = arith.constant 0 : i32
    %c0_i32_1 = arith.constant 0 : i32
    return %arg0, %c0_i32, %c0_i32_0 : i32, i32, i32
  }
  func.func @transform_2(%arg0: i32) -> (i32, i32, i32) {
    %c0_i32 = arith.constant 0 : i32
    %c0_i32_0 = arith.constant 0 : i32
    %c0_i32_1 = arith.constant 0 : i32
    %c0_i32_2 = arith.constant 0 : i32
    return %c0_i32, %c0_i32_0, %c0_i32_1 : i32, i32, i32
  }
  func.func @transform_3(%arg0: i32) -> (i32, i32) {
    %c0_i32 = arith.constant 0 : i32
    %c0_i32_0 = arith.constant 0 : i32
    %c0_i32_1 = arith.constant 0 : i32
    return %c0_i32, %c0_i32_0 : i32, i32
  }
  func.func @transform_4(%arg0: i32) -> (i32, i32, i32) {
    %c0_i32 = arith.constant 0 : i32
    %c0_i32_0 = arith.constant 0 : i32
    %c0_i32_1 = arith.constant 0 : i32
    return %arg0, %c0_i32, %c0_i32_0 : i32, i32, i32
  }
}

module attributes {stable_mosaic.version = 11 : i64} {
  func.func @_conv_gelu_kernel(%arg0: i32, %arg1: memref<1x16x256xf32, #tpu.memory_space<vmem>>, %arg2: memref<1x16x1xf32, #tpu.memory_space<vmem>>, %arg3: memref<3x256x256xf32, #tpu.memory_space<vmem>>, %arg4: memref<1x256xf32, #tpu.memory_space<vmem>>, %arg5: memref<1x16x256xf32, #tpu.memory_space<vmem>>) attributes {dimension_semantics = [#tpu.dimension_semantics<parallel>], iteration_bounds = array<i64: 2>, scalar_prefetch = 0 : i64, scratch_operands = 0 : i64, tpu.core_type = #tpu.core_type<tc>, window_params = [{transform_indices = @transform_0, window_bounds = array<i64: 1, 16, 256>}, {transform_indices = @transform_1, window_bounds = array<i64: 1, 16, 1>}, {pipeline_mode = #tpu.pipeline_mode<synchronous>, transform_indices = @transform_2, window_bounds = array<i64: 3, 256, 256>}, {pipeline_mode = #tpu.pipeline_mode<synchronous>, transform_indices = @transform_3, window_bounds = array<i64: 1, 256>}, {transform_indices = @transform_4, window_bounds = array<i64: 1, 16, 256>}]} {
    %c0 = arith.constant 0 : index
    %c0_0 = arith.constant 0 : index
    %c0_1 = arith.constant 0 : index
    %0 = vector.load %arg1[%c0, %c0_0, %c0_1] : memref<1x16x256xf32, #tpu.memory_space<vmem>>, vector<1x16x256xf32>
    %1 = vector.shape_cast %0 : vector<1x16x256xf32> to vector<16x256xf32>
    %c0_2 = arith.constant 0 : index
    %c0_3 = arith.constant 0 : index
    %c0_4 = arith.constant 0 : index
    %2 = vector.load %arg2[%c0_2, %c0_3, %c0_4] : memref<1x16x1xf32, #tpu.memory_space<vmem>>, vector<1x16x1xf32>
    %3 = vector.shape_cast %2 : vector<1x16x1xf32> to vector<16x1xf32>
    %4 = vector.broadcast %3 : vector<16x1xf32> to vector<16x256xf32>
    %5 = arith.mulf %1, %4 : vector<16x256xf32>
    %c1 = arith.constant 1 : index
    %c0_5 = arith.constant 0 : index
    %c0_6 = arith.constant 0 : index
    %6 = vector.load %arg3[%c1, %c0_5, %c0_6] : memref<3x256x256xf32, #tpu.memory_space<vmem>>, vector<1x256x256xf32>
    %7 = vector.shape_cast %6 : vector<1x256x256xf32> to vector<256x256xf32>
    %cst = arith.constant dense<0.000000e+00> : vector<16x256xf32>
    %8 = tpu.matmul %5, %7, %cst {dimension_numbers = #tpu.dot_dimension_numbers<[1], [0], [0], [1], [0, 0, 1, 1], [], []>} : vector<16x256xf32>, vector<256x256xf32>, vector<16x256xf32> -> vector<16x256xf32>
    %cst_7 = arith.constant 0.000000e+00 : f32
    %9 = vector.broadcast %cst_7 : f32 to vector<1x256xf32>
    %10 = vector.extract_strided_slice %5 {offsets = [0, 0], sizes = [15, 256], strides = [1, 1]} : vector<16x256xf32> to vector<15x256xf32>
    %11 = tpu.concatenate %9, %10 in 0 : vector<1x256xf32>, vector<15x256xf32> -> vector<16x256xf32>
    %c0_8 = arith.constant 0 : index
    %c0_9 = arith.constant 0 : index
    %c0_10 = arith.constant 0 : index
    %12 = vector.load %arg3[%c0_8, %c0_9, %c0_10] : memref<3x256x256xf32, #tpu.memory_space<vmem>>, vector<1x256x256xf32>
    %13 = vector.shape_cast %12 : vector<1x256x256xf32> to vector<256x256xf32>
    %cst_11 = arith.constant dense<0.000000e+00> : vector<16x256xf32>
    %14 = tpu.matmul %11, %13, %cst_11 {dimension_numbers = #tpu.dot_dimension_numbers<[1], [0], [0], [1], [0, 0, 1, 1], [], []>} : vector<16x256xf32>, vector<256x256xf32>, vector<16x256xf32> -> vector<16x256xf32>
    %15 = arith.addf %8, %14 : vector<16x256xf32>
    %cst_12 = arith.constant 0.000000e+00 : f32
    %16 = vector.broadcast %cst_12 : f32 to vector<1x256xf32>
    %17 = vector.extract_strided_slice %5 {offsets = [1, 0], sizes = [15, 256], strides = [1, 1]} : vector<16x256xf32> to vector<15x256xf32>
    %18 = tpu.concatenate %17, %16 in 0 : vector<15x256xf32>, vector<1x256xf32> -> vector<16x256xf32>
    %c2 = arith.constant 2 : index
    %c0_13 = arith.constant 0 : index
    %c0_14 = arith.constant 0 : index
    %19 = vector.load %arg3[%c2, %c0_13, %c0_14] : memref<3x256x256xf32, #tpu.memory_space<vmem>>, vector<1x256x256xf32>
    %20 = vector.shape_cast %19 : vector<1x256x256xf32> to vector<256x256xf32>
    %cst_15 = arith.constant dense<0.000000e+00> : vector<16x256xf32>
    %21 = tpu.matmul %18, %20, %cst_15 {dimension_numbers = #tpu.dot_dimension_numbers<[1], [0], [0], [1], [0, 0, 1, 1], [], []>} : vector<16x256xf32>, vector<256x256xf32>, vector<16x256xf32> -> vector<16x256xf32>
    %22 = arith.addf %15, %21 : vector<16x256xf32>
    %c0_16 = arith.constant 0 : index
    %c0_17 = arith.constant 0 : index
    %23 = vector.load %arg4[%c0_16, %c0_17] : memref<1x256xf32, #tpu.memory_space<vmem>>, vector<1x256xf32>
    %24 = vector.broadcast %23 : vector<1x256xf32> to vector<16x256xf32>
    %25 = arith.addf %22, %24 : vector<16x256xf32>
    %cst_18 = arith.constant 5.000000e-01 : f32
    %26 = vector.broadcast %cst_18 : f32 to vector<16x256xf32>
    %27 = arith.mulf %26, %25 : vector<16x256xf32>
    %cst_19 = arith.constant 0.797884583 : f32
    %28 = vector.broadcast %cst_19 : f32 to vector<16x256xf32>
    %29 = arith.mulf %25, %28 : vector<16x256xf32>
    %cst_20 = arith.constant 4.471500e-02 : f32
    %30 = vector.broadcast %cst_20 : f32 to vector<16x256xf32>
    %31 = arith.mulf %30, %25 : vector<16x256xf32>
    %32 = arith.mulf %31, %25 : vector<16x256xf32>
    %cst_21 = arith.constant 1.000000e+00 : f32
    %33 = vector.broadcast %cst_21 : f32 to vector<16x256xf32>
    %34 = arith.addf %33, %32 : vector<16x256xf32>
    %35 = arith.mulf %29, %34 : vector<16x256xf32>
    %36 = math.tanh %35 : vector<16x256xf32>
    %cst_22 = arith.constant 1.000000e+00 : f32
    %37 = vector.broadcast %cst_22 : f32 to vector<16x256xf32>
    %38 = arith.addf %37, %36 : vector<16x256xf32>
    %39 = arith.mulf %27, %38 : vector<16x256xf32>
    %c0_23 = arith.constant 0 : index
    %c0_24 = arith.constant 0 : index
    %c0_25 = arith.constant 0 : index
    %40 = vector.load %arg5[%c0_23, %c0_24, %c0_25] : memref<1x16x256xf32, #tpu.memory_space<vmem>>, vector<1x16x256xf32>
    %41 = vector.shape_cast %40 : vector<1x16x256xf32> to vector<16x256xf32>
    %42 = vector.shape_cast %39 : vector<16x256xf32> to vector<1x16x256xf32>
    tpu.vector_store %arg5[%c0_23, %c0_24, %c0_25], %42 {strides = array<i32>} : memref<1x16x256xf32, #tpu.memory_space<vmem>>, vector<1x16x256xf32>,
    return
  }
  func.func @transform_0(%arg0: i32) -> (i32, i32, i32) {
    %c0_i32 = arith.constant 0 : i32
    %c0_i32_0 = arith.constant 0 : i32
    %c0_i32_1 = arith.constant 0 : i32
    return %arg0, %c0_i32, %c0_i32_0 : i32, i32, i32
  }
  func.func @transform_1(%arg0: i32) -> (i32, i32, i32) {
    %c0_i32 = arith.constant 0 : i32
    %c0_i32_0 = arith.constant 0 : i32
    %c0_i32_1 = arith.constant 0 : i32
    return %arg0, %c0_i32, %c0_i32_0 : i32, i32, i32
  }
  func.func @transform_2(%arg0: i32) -> (i32, i32, i32) {
    %c0_i32 = arith.constant 0 : i32
    %c0_i32_0 = arith.constant 0 : i32
    %c0_i32_1 = arith.constant 0 : i32
    %c0_i32_2 = arith.constant 0 : i32
    return %c0_i32, %c0_i32_0, %c0_i32_1 : i32, i32, i32
  }
  func.func @transform_3(%arg0: i32) -> (i32, i32) {
    %c0_i32 = arith.constant 0 : i32
    %c0_i32_0 = arith.constant 0 : i32
    %c0_i32_1 = arith.constant 0 : i32
    return %c0_i32, %c0_i32_0 : i32, i32
  }
  func.func @transform_4(%arg0: i32) -> (i32, i32, i32) {
    %c0_i32 = arith.constant 0 : i32
    %c0_i32_0 = arith.constant 0 : i32
    %c0_i32_1 = arith.constant 0 : i32
    return %arg0, %c0_i32, %c0_i32_0 : i32, i32, i32
  }
}

</mosaic_0001>

<llo_original>
// kernel: _lambda_.3
$region0: #{_lambda_.3}
  #allocation0 [shape = 'u32[]', space=smem, size = 0x4, offset = 0x4, fixed_abs, tag = 'smem constant byte address 0x4 - core index']
  #allocation1 [shape = 'u32[144,128]{1,0:T(1,128)}', space=vmem, size = 0x12000, scoped, tag = 'internal scratch']
  %s0 = inlined_call_operand.vmem [shape: f32[2,16,128], index: 0, kind: input, shape index: {}]
  %s1 = inlined_call_operand.vmem [shape: f32[2,16,1], index: 1, kind: input, shape index: {}]
  %s2 = inlined_call_operand.hbm [shape: f32[3,128,256], index: 2, kind: input, shape index: {}]
  %s3 = inlined_call_operand.vmem [shape: f32[1,256], index: 3, kind: input, shape index: {}]
  %s4 = inlined_call_operand.vmem [shape: f32[2,16,256], index: 4, kind: output, shape index: {}]
  %s5 = sld [smem:[#allocation0]]
  $region53: #{_lambda_.3} parent=0
    _
  %s7 = ssub.s32 1, %s5
  %s8 = scalar_select 0, %s7, %s5
  $region1: #{_lambda_.3} parent=0
    #allocation2 [shape = 'u8[393216]{0}', space=vmem, size = 0x60000, scoped, tag = 'input window, operand 2, single buffered']
    #allocation3 [shape = 's32[2]{0}', space=sflag, size = 0x8, scoped, tag = 'scoped memory for _lambda_.3']
    %9 = vsyncpa [#allocation3], 0
    loop: start=0, step=1, limit=4
    $region2: #{_lambda_.3} parent=1 // loop_pre_header
      _
    $region3: #{_lambda_.3} parent=1 // loop_header
      %s11 = sphi 0, %s15
      %p12 = scmp.ge.s32.totalorder %s11, 4
      %s21 = sphi 0, %s23
      %s24 = sphi 0, %s21
      %s25 = sphi 0, %s24
      %s41 = sphi 0, %s25
      %s47 = sphi 0, %s49
      %s50 = sphi 0, %s47
      %s51 = sphi 0, %s50
      %s67 = sphi 0, %s51
      %s71 = sphi 0, %s71
      %s73 = sphi 0, %s71
      %s74 = sphi 0, %s73
      %s88 = sphi 0, %s74
      %s92 = sphi 0, %s92
      %s94 = sphi 0, %s92
      %s95 = sphi 0, %s94
      %s109 = sphi 0, %s95
      %s115 = sphi 0, %s117
      %s118 = sphi 0, %s115
      %s119 = sphi 0, %s118
      %s135 = sphi 0, %s119
    $region4: #{_lambda_.3} parent=1 // loop_header_branch
      %14 = sbr.rel (%p12) target = $region8
    $region5: #{_lambda_.3} parent=1 // loop_body
      %s16 = ssub.s32 %s11, 1
      %s17 = ssub.s32 %s11, 2
      %s18 = sadd.s32 %s11, 1
      %s19 = ssub.s32 %s11, %s18
      %p20 = scmp.eq.s32.totalorder %s19, 0
      %s22 = sadd.s32 %s21, 1
      %s23 = scalar_select %p20, %s21, %s22
      %p26 = pneg %p20
      %p27 = scmp.eq.s32.totalorder %s11, 1
      %p28 = por %p26, %p27
      %p29 = scmp.ne.s32.totalorder %s21, %s24
      %p30 = scmp.eq.s32.totalorder %s11, 0
      %p31 = por %p29, %p30
      %p32 = scmp.ne.s32.totalorder %s21, %s24
      %p33 = scmp.eq.s32.totalorder %s16, 1
      %p34 = por %p32, %p33
      %p35 = scmp.ne.s32.totalorder %s24, %s25
      %p36 = scmp.eq.s32.totalorder %s16, 0
      %p37 = por %p35, %p36
      %p38 = scmp.ne.s32.totalorder %s24, %s25
      %p39 = scmp.eq.s32.totalorder %s17, 1
      %p40 = por %p38, %p39
      %p42 = scmp.ne.s32.totalorder %s25, %s41
      %p43 = scmp.eq.s32.totalorder %s17, 0
      %p44 = por %p42, %p43
      %s45 = ssub.s32 %s11, %s18
      %p46 = scmp.eq.s32.totalorder %s45, 0
      %s48 = sadd.s32 %s47, 1
      %s49 = scalar_select %p46, %s47, %s48
      %p52 = pneg %p46
      %p53 = scmp.eq.s32.totalorder %s11, 1
      %p54 = por %p52, %p53
      %p55 = scmp.ne.s32.totalorder %s47, %s50
      %p56 = scmp.eq.s32.totalorder %s11, 0
      %p57 = por %p55, %p56
      %p58 = scmp.ne.s32.totalorder %s47, %s50
      %p59 = scmp.eq.s32.totalorder %s16, 1
      %p60 = por %p58, %p59
      %p61 = scmp.ne.s32.totalorder %s50, %s51
      %p62 = scmp.eq.s32.totalorder %s16, 0
      %p63 = por %p61, %p62
      %p64 = scmp.ne.s32.totalorder %s50, %s51
      %p65 = scmp.eq.s32.totalorder %s17, 1
      %p66 = por %p64, %p65
      %p68 = scmp.ne.s32.totalorder %s51, %s67
      %p69 = scmp.eq.s32.totalorder %s17, 0
      %p70 = por %p68, %p69
      %s72 = sadd.s32 %s71, 1
      %p75 = scmp.eq.s32.totalorder %s11, 1
      %p76 = scmp.ne.s32.totalorder %s71, %s73
      %p77 = scmp.eq.s32.totalorder %s11, 0
      %p78 = por %p76, %p77
      %p79 = scmp.ne.s32.totalorder %s71, %s73
      %p80 = scmp.eq.s32.totalorder %s16, 1
      %p81 = por %p79, %p80
      %p82 = scmp.ne.s32.totalorder %s73, %s74
      %p83 = scmp.eq.s32.totalorder %s16, 0
      %p84 = por %p82, %p83
      %p85 = scmp.ne.s32.totalorder %s73, %s74
      %p86 = scmp.eq.s32.totalorder %s17, 1
      %p87 = por %p85, %p86
      %p89 = scmp.ne.s32.totalorder %s74, %s88
      %p90 = scmp.eq.s32.totalorder %s17, 0
      %p91 = por %p89, %p90
      %s93 = sadd.s32 %s92, 1
      %p96 = scmp.eq.s32.totalorder %s11, 1
      %p97 = scmp.ne.s32.totalorder %s92, %s94
      %p98 = scmp.eq.s32.totalorder %s11, 0
      %p99 = por %p97, %p98
      %p100 = scmp.ne.s32.totalorder %s92, %s94
      %p101 = scmp.eq.s32.totalorder %s16, 1
      %p102 = por %p100, %p101
      %p103 = scmp.ne.s32.totalorder %s94, %s95
      %p104 = scmp.eq.s32.totalorder %s16, 0
      %p105 = por %p103, %p104
      %p106 = scmp.ne.s32.totalorder %s94, %s95
      %p107 = scmp.eq.s32.totalorder %s17, 1
      %p108 = por %p106, %p107
      %p110 = scmp.ne.s32.totalorder %s95, %s109
      %p111 = scmp.eq.s32.totalorder %s17, 0
      %p112 = por %p110, %p111
      %s113 = ssub.s32 %s11, %s18
      %p114 = scmp.eq.s32.totalorder %s113, 0
      %s116 = sadd.s32 %s115, 1
      %s117 = scalar_select %p114, %s115, %s116
      %p120 = pneg %p114
      %p121 = scmp.eq.s32.totalorder %s11, 1
      %p122 = por %p120, %p121
      %p123 = scmp.ne.s32.totalorder %s115, %s118
      %p124 = scmp.eq.s32.totalorder %s11, 0
      %p125 = por %p123, %p124
      %p126 = scmp.ne.s32.totalorder %s115, %s118
      %p127 = scmp.eq.s32.totalorder %s16, 1
      %p128 = por %p126, %p127
      %p129 = scmp.ne.s32.totalorder %s118, %s119
      %p130 = scmp.eq.s32.totalorder %s16, 0
      %p131 = por %p129, %p130
      %p132 = scmp.ne.s32.totalorder %s118, %s119
      %p133 = scmp.eq.s32.totalorder %s17, 1
      %p134 = por %p132, %p133
      %p136 = scmp.ne.s32.totalorder %s119, %s135
      %p137 = scmp.eq.s32.totalorder %s17, 0
      %p138 = por %p136, %p137
      %p139 = scmp.le.s32.totalorder 1, %s11
      %p140 = scmp.lt.s32.totalorder %s11, 3
      %p141 = pnand %p139, %p140
      %p142 = pneg %p141
      // Predicated region
      $region9: #{_lambda_.3} parent=5 // pred_check
        _
      $region10: #{_lambda_.3} parent=5 // pred_check_branch
        %144 = sbr.rel (%p141) target = $region12
      $region11: #{_lambda_.3} parent=5 // pred_region
        %s145 = ssub.s32 %s11, 1
        // Predicated region
        $region13: #{_lambda_.3} parent=11 // pred_check
          %p146 = pneg %p84
        $region14: #{_lambda_.3} parent=11 // pred_check_branch
          %148 = sbr.rel (%p146) target = $region16
        $region15: #{_lambda_.3} parent=11 // pred_region
          %s150 = ssub.s32 12288, 12288
          %151 = vsyncadd [#allocation3], %s150
          %s152 = sshll.u32 [#allocation2], 4
          %s153 = int_to_ptr.vmem [resolvable:$true] %s152
          %158 = dma.hbm_to_vmem [thread:$0]  %s2, 12288, %s153, [#allocation3], 256, 256, 16
        $region16: #{_lambda_.3} parent=11 // pred_fallthru
          _
        // Predicated region
        $region17: #{_lambda_.3} parent=11 // pred_check
          %p159 = pneg %p105
        $region18: #{_lambda_.3} parent=11 // pred_check_branch
          %161 = sbr.rel (%p159) target = $region20
        $region19: #{_lambda_.3} parent=11 // pred_region
          _
        $region20: #{_lambda_.3} parent=11 // pred_fallthru
          _
      $region12: #{_lambda_.3} parent=5 // pred_fallthru
        _
      %p162 = scmp.lt.s32.totalorder %s11, 2
      // Predicated region
      $region21: #{_lambda_.3} parent=5 // pred_check
        %p163 = pneg %p162
      $region22: #{_lambda_.3} parent=5 // pred_check_branch
        %165 = sbr.rel (%p163) target = $region24
      $region23: #{_lambda_.3} parent=5 // pred_region
        // Predicated region
        $region25: #{_lambda_.3} parent=23 // pred_check
          %p166 = pneg %p31
        $region26: #{_lambda_.3} parent=23 // pred_check_branch
          %168 = sbr.rel (%p166) target = $region28
        $region27: #{_lambda_.3} parent=23 // pred_region
          %p169 = scmp.lt.s32.totalorder %s11, 1
          %s170 = scalar_select %p169, %s11, 1
          %s171 = smul.addr %s170, 2
          %s172 = smul.addr %s171, 8
          %s173 = scalar_lea.vmem %s0, %s172
        $region28: #{_lambda_.3} parent=23 // pred_fallthru
          _
        // Predicated region
        $region29: #{_lambda_.3} parent=23 // pred_check
          %p174 = pneg %p57
        $region30: #{_lambda_.3} parent=23 // pred_check_branch
          %176 = sbr.rel (%p174) target = $region32
        $region31: #{_lambda_.3} parent=23 // pred_region
          %p177 = scmp.lt.s32.totalorder %s11, 1
          %s178 = scalar_select %p177, %s11, 1
          %s179 = smul.addr %s178, 2
          %s180 = smul.addr %s179, 8
          %s181 = scalar_lea.vmem %s1, %s180
        $region32: #{_lambda_.3} parent=23 // pred_fallthru
          _
      $region24: #{_lambda_.3} parent=5 // pred_fallthru
        _
      %p182 = scmp.le.s32.totalorder 1, %s11
      %p183 = scmp.lt.s32.totalorder %s11, 3
      %p184 = pnand %p182, %p183
      %p185 = pneg %p184
      // Predicated region
      $region33: #{_lambda_.3} parent=5 // pred_check
        _
      $region34: #{_lambda_.3} parent=5 // pred_check_branch
        %187 = sbr.rel (%p184) target = $region36
      $region35: #{_lambda_.3} parent=5 // pred_region
        %s188 = ssub.s32 %s11, 1
        // Predicated region
        $region37: #{_lambda_.3} parent=35 // pred_check
          %p189 = pneg %p84
        $region38: #{_lambda_.3} parent=35 // pred_check_branch
          %191 = sbr.rel (%p189) target = $region40
        $region39: #{_lambda_.3} parent=35 // pred_region
          %192 = dma.done [#allocation3], 12288
        $region40: #{_lambda_.3} parent=35 // pred_fallthru
          _
        %p193 = scmp.lt.s32.totalorder %s16, 1
        %s194 = scalar_select %p193, %s16, 1
        %s195 = smul.addr %s194, 2
        %s196 = smul.addr %s195, 8
        %s197 = scalar_lea.vmem %s0, %s196
        %p198 = pneg %p37
        %p199 = pneg %p34
        %p200 = scmp.lt.s32.totalorder %s16, 1
        %s201 = scalar_select %p200, %s16, 1
        %s202 = smul.addr %s201, 2
        %s203 = smul.addr %s202, 8
        %s204 = scalar_lea.vmem %s1, %s203
        %p205 = pneg %p63
        %p206 = pneg %p60
        %p207 = pneg %p84
        %p208 = pneg %p81
        %p209 = pneg %p105
        %p210 = pneg %p102
        %p211 = pneg %p131
        %p212 = pneg %p128
        %p213 = scmp.lt.s32.totalorder %s16, 1
        %s214 = scalar_select %p213, %s16, 1
        %s215 = smul.addr %s214, 4
        %s216 = smul.addr %s215, 8
        %s217 = scalar_lea.vmem %s4, %s216
        %p218 = scmp.lt.s32.totalorder %s16, 1
        %s219 = scalar_select %p218, %s16, 1
        %s220 = smul.addr %s219, 2
        %s221 = smul.addr %s220, 8
        %s222 = scalar_lea.vmem %s0, %s221
        %p223 = scmp.lt.s32.totalorder %s16, 1
        %s224 = scalar_select %p223, %s16, 1
        %s225 = smul.addr %s224, 2
        %s226 = smul.addr %s225, 8
        %s227 = scalar_lea.vmem %s1, %s226
        %p228 = scmp.lt.s32.totalorder %s16, 1
        %s229 = scalar_select %p228, %s16, 1
        %s230 = smul.addr %s229, 4
        %s231 = smul.addr %s230, 8
        %s232 = scalar_lea.vmem %s4, %s231
        %v233 = vld [vmem:[%s222] sm:$0xff]
        %v234 = vld [vmem:[%s222 + $0x8] sm:$0xff]
        %v235 = vld [vmem:[%s227] sm:$0xff]
        %v236 = vld [vmem:[%s227 + $0x8] sm:$0xff]
        %238 = vset.pattern.permute.xlu0 0
        %239 = vperm.xlu0 %238, %v235
        %v240 = vpop.permute.xlu0 %239
        %243 = vset.pattern.permute.xlu0 0
        %244 = vperm.xlu0 %243, %v236
        %v245 = vpop.permute.xlu0 %244
        %v247 = vmul.f32 %v233, %v240
        %v248 = vmul.f32 %v234, %v245
        %s249 = scalar_lea.vmem [#allocation2], 256
        %v250 = vld [vmem:[%s249] sm:$0xff]
        %v251 = vld [vmem:[%s249 + $0x8] sm:$0xff]
        %v252 = vld [vmem:[%s249 + $0x10] sm:$0xff]
        %v253 = vld [vmem:[%s249 + $0x18] sm:$0xff]
        %v254 = vld [vmem:[%s249 + $0x20] sm:$0xff]
        %v255 = vld [vmem:[%s249 + $0x28] sm:$0xff]
        %v256 = vld [vmem:[%s249 + $0x30] sm:$0xff]
        %v257 = vld [vmem:[%s249 + $0x38] sm:$0xff]
        %v258 = vld [vmem:[%s249 + $0x40] sm:$0xff]
        %v259 = vld [vmem:[%s249 + $0x48] sm:$0xff]
        %v260 = vld [vmem:[%s249 + $0x50] sm:$0xff]
        %v261 = vld [vmem:[%s249 + $0x58] sm:$0xff]
        %v262 = vld [vmem:[%s249 + $0x60] sm:$0xff]
        %v263 = vld [vmem:[%s249 + $0x68] sm:$0xff]
        %v264 = vld [vmem:[%s249 + $0x70] sm:$0xff]
        %v265 = vld [vmem:[%s249 + $0x78] sm:$0xff]
        %v266 = vld [vmem:[%s249 + $0x80] sm:$0xff]
        %v267 = vld [vmem:[%s249 + $0x88] sm:$0xff]
        %v268 = vld [vmem:[%s249 + $0x90] sm:$0xff]
        %v269 = vld [vmem:[%s249 + $0x98] sm:$0xff]
        %v270 = vld [vmem:[%s249 + $0xa0] sm:$0xff]
        %v271 = vld [vmem:[%s249 + $0xa8] sm:$0xff]
        %v272 = vld [vmem:[%s249 + $0xb0] sm:$0xff]
        %v273 = vld [vmem:[%s249 + $0xb8] sm:$0xff]
        %v274 = vld [vmem:[%s249 + $0xc0] sm:$0xff]
        %v275 = vld [vmem:[%s249 + $0xc8] sm:$0xff]
        %v276 = vld [vmem:[%s249 + $0xd0] sm:$0xff]
        %v277 = vld [vmem:[%s249 + $0xd8] sm:$0xff]
        %v278 = vld [vmem:[%s249 + $0xe0] sm:$0xff]
        %v279 = vld [vmem:[%s249 + $0xe8] sm:$0xff]
        %v280 = vld [vmem:[%s249 + $0xf0] sm:$0xff]
        %v281 = vld [vmem:[%s249 + $0xf8] sm:$0xff]
        %vm284 = vcmask 1040384
        %v285 = vrot.slane %v247, 7
        %v286 = vrot.slane %v248, 7
        %v287 = vsel %vm284, %v285, %v286
        %v290 = vsel %vm284, 0.0, %v285
        %v291 = vld [vmem:[#allocation2] sm:$0xff]
        %v292 = vld [vmem:[#allocation2 + $0x8] sm:$0xff]
        %v293 = vld [vmem:[#allocation2 + $0x10] sm:$0xff]
        %v294 = vld [vmem:[#allocation2 + $0x18] sm:$0xff]
        %v295 = vld [vmem:[#allocation2 + $0x20] sm:$0xff]
        %v296 = vld [vmem:[#allocation2 + $0x28] sm:$0xff]
        %v297 = vld [vmem:[#allocation2 + $0x30] sm:$0xff]
        %v298 = vld [vmem:[#allocation2 + $0x38] sm:$0xff]
        %v299 = vld [vmem:[#allocation2 + $0x40] sm:$0xff]
        %v300 = vld [vmem:[#allocation2 + $0x48] sm:$0xff]
        %v301 = vld [vmem:[#allocation2 + $0x50] sm:$0xff]
        %v302 = vld [vmem:[#allocation2 + $0x58] sm:$0xff]
        %v303 = vld [vmem:[#allocation2 + $0x60] sm:$0xff]
        %v304 = vld [vmem:[#allocation2 + $0x68] sm:$0xff]
        %v305 = vld [vmem:[#allocation2 + $0x70] sm:$0xff]
        %v306 = vld [vmem:[#allocation2 + $0x78] sm:$0xff]
        %v307 = vld [vmem:[#allocation2 + $0x80] sm:$0xff]
        %v308 = vld [vmem:[#allocation2 + $0x88] sm:$0xff]
        %v309 = vld [vmem:[#allocation2 + $0x90] sm:$0xff]
        %v310 = vld [vmem:[#allocation2 + $0x98] sm:$0xff]
        %v311 = vld [vmem:[#allocation2 + $0xa0] sm:$0xff]
        %v312 = vld [vmem:[#allocation2 + $0xa8] sm:$0xff]
        %v313 = vld [vmem:[#allocation2 + $0xb0] sm:$0xff]
        %v314 = vld [vmem:[#allocation2 + $0xb8] sm:$0xff]
        %v315 = vld [vmem:[#allocation2 + $0xc0] sm:$0xff]
        %v316 = vld [vmem:[#allocation2 + $0xc8] sm:$0xff]
        %v317 = vld [vmem:[#allocation2 + $0xd0] sm:$0xff]
        %v318 = vld [vmem:[#allocation2 + $0xd8] sm:$0xff]
        %v319 = vld [vmem:[#allocation2 + $0xe0] sm:$0xff]
        %v320 = vld [vmem:[#allocation2 + $0xe8] sm:$0xff]
        %v321 = vld [vmem:[#allocation2 + $0xf0] sm:$0xff]
        %v322 = vld [vmem:[#allocation2 + $0xf8] sm:$0xff]
        %323 = vmatprep.subr.mxu0 %v292
        %324 = vmatpush1.msra.mxu0 %v291
        %325 = vmatprep.subr.mxu0 %v294
        %326 = vmatpush1.msra.mxu0 %v293
        %327 = vmatprep.subr.mxu0 %v296
        %328 = vmatpush1.msra.mxu0 %v295
        %329 = vmatprep.subr.mxu0 %v298
        %330 = vmatpush1.msra.mxu0 %v297
        %331 = vmatprep.subr.mxu0 %v300
        %332 = vmatpush1.msra.mxu0 %v299
        %333 = vmatprep.subr.mxu0 %v302
        %334 = vmatpush1.msra.mxu0 %v301
        %335 = vmatprep.subr.mxu0 %v304
        %336 = vmatpush1.msra.mxu0 %v303
        %337 = vmatprep.subr.mxu0 %v306
        %338 = vmatpush1.msra.mxu0 %v305
        %339 = vmatprep.subr.mxu0 %v308
        %340 = vmatpush1.msra.mxu0 %v307
        %341 = vmatprep.subr.mxu0 %v310
        %342 = vmatpush1.msra.mxu0 %v309
        %343 = vmatprep.subr.mxu0 %v312
        %344 = vmatpush1.msra.mxu0 %v311
        %345 = vmatprep.subr.mxu0 %v314
        %346 = vmatpush1.msra.mxu0 %v313
        %347 = vmatprep.subr.mxu0 %v316
        %348 = vmatpush1.msra.mxu0 %v315
        %349 = vmatprep.subr.mxu0 %v318
        %350 = vmatpush1.msra.mxu0 %v317
        %351 = vmatprep.subr.mxu0 %v320
        %352 = vmatpush1.msra.mxu0 %v319
        %353 = vmatprep.subr.mxu0 %v322
        %354 = vmatpush1.msra.mxu0 %v321
        %355 = vmatprep.subr.mxu0 0.0
        %356 = vmatpush1.msra.mxu0 0.0
        %357 = vmatprep.subr.mxu0 0.0
        %358 = vmatpush1.msra.mxu0 0.0
        %359 = vmatprep.subr.mxu0 0.0
        %360 = vmatpush1.msra.mxu0 0.0
        %361 = vmatprep.subr.mxu0 0.0
        %362 = vmatpush1.msra.mxu0 0.0
        %363 = vmatprep.subr.mxu0 0.0
        %364 = vmatpush1.msra.mxu0 0.0
        %365 = vmatprep.subr.mxu0 0.0
        %366 = vmatpush1.msra.mxu0 0.0
        %367 = vmatprep.subr.mxu0 0.0
        %368 = vmatpush1.msra.mxu0 0.0
        %369 = vmatprep.subr.mxu0 0.0
        %370 = vmatpush1.msra.mxu0 0.0
        %371 = vmatprep.subr.mxu0 0.0
        %372 = vmatpush1.msra.mxu0 0.0
        %373 = vmatprep.subr.mxu0 0.0
        %374 = vmatpush1.msra.mxu0 0.0
        %375 = vmatprep.subr.mxu0 0.0
        %376 = vmatpush1.msra.mxu0 0.0
        %377 = vmatprep.subr.mxu0 0.0
        %378 = vmatpush1.msra.mxu0 0.0
        %379 = vmatprep.subr.mxu0 0.0
        %380 = vmatpush1.msra.mxu0 0.0
        %381 = vmatprep.subr.mxu0 0.0
        %382 = vmatpush1.msra.mxu0 0.0
        %383 = vmatprep.subr.mxu0 0.0
        %384 = vmatpush1.msra.mxu0 0.0
        %385 = vmatprep.subr.mxu0 0.0
        %386 = vmatpush1.msra.mxu0 0.0
        %387 = vmatprep.mubr.f32.mxu0 0.0
        %388 = vmatmul.mubr.f32.gmra.mrb[0].mxu0 %v290
        %v389 = vpop.f32.mrb[0].mxu0
        %v390 = vadd.f32 0.0, %v389
        %v391 = vpop.f32.mrb[0].mxu0
        %v392 = vadd.f32 0.0, %v391
        %393 = vmatprep.mubr.f32.mxu0 0.0
        %394 = vmatmul.mubr.f32.gmra.mrb[0].mxu0 %v287
        %v395 = vpop.f32.mrb[0].mxu0
        %v396 = vadd.f32 0.0, %v395
        %v397 = vpop.f32.mrb[0].mxu0
        %v398 = vadd.f32 0.0, %v397
        %399 = vdwg.mxu0
        %400 = vmatprep.subr.mxu0 %v251
        %401 = vmatpush1.msra.mxu0 %v250
        %402 = vmatprep.subr.mxu0 %v253
        %403 = vmatpush1.msra.mxu0 %v252
        %404 = vmatprep.subr.mxu0 %v255
        %405 = vmatpush1.msra.mxu0 %v254
        %406 = vmatprep.subr.mxu0 %v257
        %407 = vmatpush1.msra.mxu0 %v256
        %408 = vmatprep.subr.mxu0 %v259
        %409 = vmatpush1.msra.mxu0 %v258
        %410 = vmatprep.subr.mxu0 %v261
        %411 = vmatpush1.msra.mxu0 %v260
        %412 = vmatprep.subr.mxu0 %v263
        %413 = vmatpush1.msra.mxu0 %v262
        %414 = vmatprep.subr.mxu0 %v265
        %415 = vmatpush1.msra.mxu0 %v264
        %416 = vmatprep.subr.mxu0 %v267
        %417 = vmatpush1.msra.mxu0 %v266
        %418 = vmatprep.subr.mxu0 %v269
        %419 = vmatpush1.msra.mxu0 %v268
        %420 = vmatprep.subr.mxu0 %v271
        %421 = vmatpush1.msra.mxu0 %v270
        %422 = vmatprep.subr.mxu0 %v273
        %423 = vmatpush1.msra.mxu0 %v272
        %424 = vmatprep.subr.mxu0 %v275
        %425 = vmatpush1.msra.mxu0 %v274
        %426 = vmatprep.subr.mxu0 %v277
        %427 = vmatpush1.msra.mxu0 %v276
        %428 = vmatprep.subr.mxu0 %v279
        %429 = vmatpush1.msra.mxu0 %v278
        %430 = vmatprep.subr.mxu0 %v281
        %431 = vmatpush1.msra.mxu0 %v280
        %432 = vmatprep.subr.mxu0 0.0
        %433 = vmatpush1.msra.mxu0 0.0
        %434 = vmatprep.subr.mxu0 0.0
        %435 = vmatpush1.msra.mxu0 0.0
        %436 = vmatprep.subr.mxu0 0.0
        %437 = vmatpush1.msra.mxu0 0.0
        %438 = vmatprep.subr.mxu0 0.0
        %439 = vmatpush1.msra.mxu0 0.0
        %440 = vmatprep.subr.mxu0 0.0
        %441 = vmatpush1.msra.mxu0 0.0
        %442 = vmatprep.subr.mxu0 0.0
        %443 = vmatpush1.msra.mxu0 0.0
        %444 = vmatprep.subr.mxu0 0.0
        %445 = vmatpush1.msra.mxu0 0.0
        %446 = vmatprep.subr.mxu0 0.0
        %447 = vmatpush1.msra.mxu0 0.0
        %448 = vmatprep.subr.mxu0 0.0
        %449 = vmatpush1.msra.mxu0 0.0
        %450 = vmatprep.subr.mxu0 0.0
        %451 = vmatpush1.msra.mxu0 0.0
        %452 = vmatprep.subr.mxu0 0.0
        %453 = vmatpush1.msra.mxu0 0.0
        %454 = vmatprep.subr.mxu0 0.0
        %455 = vmatpush1.msra.mxu0 0.0
        %456 = vmatprep.subr.mxu0 0.0
        %457 = vmatpush1.msra.mxu0 0.0
        %458 = vmatprep.subr.mxu0 0.0
        %459 = vmatpush1.msra.mxu0 0.0
        %460 = vmatprep.subr.mxu0 0.0
        %461 = vmatpush1.msra.mxu0 0.0
        %462 = vmatprep.subr.mxu0 0.0
        %463 = vmatpush1.msra.mxu0 0.0
        %464 = vmatprep.mubr.f32.mxu0 0.0
        %465 = vmatmul.mubr.f32.gmra.mrb[0].mxu0 %v247
        %v466 = vpop.f32.mrb[0].mxu0
        %v467 = vadd.f32 %v390, %v466
        %v468 = vpop.f32.mrb[0].mxu0
        %v469 = vadd.f32 %v392, %v468
        %470 = vmatprep.mubr.f32.mxu0 0.0
        %471 = vmatmul.mubr.f32.gmra.mrb[0].mxu0 %v248
        %v472 = vpop.f32.mrb[0].mxu0
        %v473 = vadd.f32 %v396, %v472
        %v474 = vpop.f32.mrb[0].mxu0
        %v475 = vadd.f32 %v398, %v474
        %476 = vdwg.mxu0
        %vm477 = vcmask 1046528
        %v478 = vrot.slane %v247, 1
        %v479 = vrot.slane %v248, 1
        %v480 = vsel %vm477, %v478, %v479
        %v483 = vsel %vm477, %v479, 0.0
        %s484 = scalar_lea.vmem [#allocation2], 512
        %v485 = vld [vmem:[%s484] sm:$0xff]
        %v486 = vld [vmem:[%s484 + $0x8] sm:$0xff]
        %v487 = vld [vmem:[%s484 + $0x10] sm:$0xff]
        %v488 = vld [vmem:[%s484 + $0x18] sm:$0xff]
        %v489 = vld [vmem:[%s484 + $0x20] sm:$0xff]
        %v490 = vld [vmem:[%s484 + $0x28] sm:$0xff]
        %v491 = vld [vmem:[%s484 + $0x30] sm:$0xff]
        %v492 = vld [vmem:[%s484 + $0x38] sm:$0xff]
        %v493 = vld [vmem:[%s484 + $0x40] sm:$0xff]
        %v494 = vld [vmem:[%s484 + $0x48] sm:$0xff]
        %v495 = vld [vmem:[%s484 + $0x50] sm:$0xff]
        %v496 = vld [vmem:[%s484 + $0x58] sm:$0xff]
        %v497 = vld [vmem:[%s484 + $0x60] sm:$0xff]
        %v498 = vld [vmem:[%s484 + $0x68] sm:$0xff]
        %v499 = vld [vmem:[%s484 + $0x70] sm:$0xff]
        %v500 = vld [vmem:[%s484 + $0x78] sm:$0xff]
        %v501 = vld [vmem:[%s484 + $0x80] sm:$0xff]
        %v502 = vld [vmem:[%s484 + $0x88] sm:$0xff]
        %v503 = vld [vmem:[%s484 + $0x90] sm:$0xff]
        %v504 = vld [vmem:[%s484 + $0x98] sm:$0xff]
        %v505 = vld [vmem:[%s484 + $0xa0] sm:$0xff]
        %v506 = vld [vmem:[%s484 + $0xa8] sm:$0xff]
        %v507 = vld [vmem:[%s484 + $0xb0] sm:$0xff]
        %v508 = vld [vmem:[%s484 + $0xb8] sm:$0xff]
        %v509 = vld [vmem:[%s484 + $0xc0] sm:$0xff]
        %v510 = vld [vmem:[%s484 + $0xc8] sm:$0xff]
        %v511 = vld [vmem:[%s484 + $0xd0] sm:$0xff]
        %v512 = vld [vmem:[%s484 + $0xd8] sm:$0xff]
        %v513 = vld [vmem:[%s484 + $0xe0] sm:$0xff]
        %v514 = vld [vmem:[%s484 + $0xe8] sm:$0xff]
        %v515 = vld [vmem:[%s484 + $0xf0] sm:$0xff]
        %v516 = vld [vmem:[%s484 + $0xf8] sm:$0xff]
        %517 = vmatprep.subr.mxu0 %v486
        %518 = vmatpush1.msra.mxu0 %v485
        %519 = vmatprep.subr.mxu0 %v488
        %520 = vmatpush1.msra.mxu0 %v487
        %521 = vmatprep.subr.mxu0 %v490
        %522 = vmatpush1.msra.mxu0 %v489
        %523 = vmatprep.subr.mxu0 %v492
        %524 = vmatpush1.msra.mxu0 %v491
        %525 = vmatprep.subr.mxu0 %v494
        %526 = vmatpush1.msra.mxu0 %v493
        %527 = vmatprep.subr.mxu0 %v496
        %528 = vmatpush1.msra.mxu0 %v495
        %529 = vmatprep.subr.mxu0 %v498
        %530 = vmatpush1.msra.mxu0 %v497
        %531 = vmatprep.subr.mxu0 %v500
        %532 = vmatpush1.msra.mxu0 %v499
        %533 = vmatprep.subr.mxu0 %v502
        %534 = vmatpush1.msra.mxu0 %v501
        %535 = vmatprep.subr.mxu0 %v504
        %536 = vmatpush1.msra.mxu0 %v503
        %537 = vmatprep.subr.mxu0 %v506
        %538 = vmatpush1.msra.mxu0 %v505
        %539 = vmatprep.subr.mxu0 %v508
        %540 = vmatpush1.msra.mxu0 %v507
        %541 = vmatprep.subr.mxu0 %v510
        %542 = vmatpush1.msra.mxu0 %v509
        %543 = vmatprep.subr.mxu0 %v512
        %544 = vmatpush1.msra.mxu0 %v511
        %545 = vmatprep.subr.mxu0 %v514
        %546 = vmatpush1.msra.mxu0 %v513
        %547 = vmatprep.subr.mxu0 %v516
        %548 = vmatpush1.msra.mxu0 %v515
        %549 = vmatprep.subr.mxu0 0.0
        %550 = vmatpush1.msra.mxu0 0.0
        %551 = vmatprep.subr.mxu0 0.0
        %552 = vmatpush1.msra.mxu0 0.0
        %553 = vmatprep.subr.mxu0 0.0
        %554 = vmatpush1.msra.mxu0 0.0
        %555 = vmatprep.subr.mxu0 0.0
        %556 = vmatpush1.msra.mxu0 0.0
        %557 = vmatprep.subr.mxu0 0.0
        %558 = vmatpush1.msra.mxu0 0.0
        %559 = vmatprep.subr.mxu0 0.0
        %560 = vmatpush1.msra.mxu0 0.0
        %561 = vmatprep.subr.mxu0 0.0
        %562 = vmatpush1.msra.mxu0 0.0
        %563 = vmatprep.subr.mxu0 0.0
        %564 = vmatpush1.msra.mxu0 0.0
        %565 = vmatprep.subr.mxu0 0.0
        %566 = vmatpush1.msra.mxu0 0.0
        %567 = vmatprep.subr.mxu0 0.0
        %568 = vmatpush1.msra.mxu0 0.0
        %569 = vmatprep.subr.mxu0 0.0
        %570 = vmatpush1.msra.mxu0 0.0
        %571 = vmatprep.subr.mxu0 0.0
        %572 = vmatpush1.msra.mxu0 0.0
        %573 = vmatprep.subr.mxu0 0.0
        %574 = vmatpush1.msra.mxu0 0.0
        %575 = vmatprep.subr.mxu0 0.0
        %576 = vmatpush1.msra.mxu0 0.0
        %577 = vmatprep.subr.mxu0 0.0
        %578 = vmatpush1.msra.mxu0 0.0
        %579 = vmatprep.subr.mxu0 0.0
        %580 = vmatpush1.msra.mxu0 0.0
        %581 = vmatprep.mubr.f32.mxu0 0.0
        %582 = vmatmul.mubr.f32.gmra.mrb[0].mxu0 %v480
        %v583 = vpop.f32.mrb[0].mxu0
        %v584 = vadd.f32 0.0, %v583
        %v585 = vpop.f32.mrb[0].mxu0
        %v586 = vadd.f32 0.0, %v585
        %587 = vmatprep.mubr.f32.mxu0 0.0
        %588 = vmatmul.mubr.f32.gmra.mrb[0].mxu0 %v483
        %v589 = vpop.f32.mrb[0].mxu0
        %v590 = vadd.f32 0.0, %v589
        %v591 = vpop.f32.mrb[0].mxu0
        %v592 = vadd.f32 0.0, %v591
        %593 = vdwg.mxu0
        %v594 = vadd.f32 %v467, %v584
        %v595 = vadd.f32 %v469, %v586
        %v596 = vadd.f32 %v473, %v590
        %v597 = vadd.f32 %v475, %v592
        %v598 = vld [vmem:[%s3] sm:$0x3]
        %v600 = vlaneseq
        %v601 = vshrl.u32 %v600, 7
        %v602 = vsub.s32 0, %v601
        %v603 = vrot.slane %v598, %v602
        %v604 = vlaneseq
        %v605 = vshrl.u32 %v604, 7
        %v606 = vsub.s32 1, %v605
        %v607 = vrot.slane %v598, %v606
        %v610 = vadd.f32 %v594, %v603
        %v611 = vadd.f32 %v595, %v607
        %v612 = vadd.f32 %v596, %v603
        %v613 = vadd.f32 %v597, %v607
        %v614 = vmul.f32 %v610, 0.5
        %v615 = vmul.f32 %v611, 0.5
        %v616 = vmul.f32 %v612, 0.5
        %v617 = vmul.f32 %v613, 0.5
        %v618 = vmul.f32 %v610, 0.7978846
        %v619 = vmul.f32 %v611, 0.7978846
        %v620 = vmul.f32 %v612, 0.7978846
        %v621 = vmul.f32 %v613, 0.7978846
        %v622 = vmul.f32 %v610, 0.044715
        %v623 = vmul.f32 %v611, 0.044715
        %v624 = vmul.f32 %v612, 0.044715
        %v625 = vmul.f32 %v613, 0.044715
        %v626 = vmul.f32 %v622, %v610
        %v627 = vmul.f32 %v623, %v611
        %v628 = vmul.f32 %v624, %v612
        %v629 = vmul.f32 %v625, %v613
        %v630 = vadd.f32 %v626, 1.0
        %v631 = vadd.f32 %v627, 1.0
        %v632 = vadd.f32 %v628, 1.0
        %v633 = vadd.f32 %v629, 1.0
        %v634 = vmul.f32 %v618, %v630
        %v635 = vmul.f32 %v619, %v631
        %v636 = vmul.f32 %v620, %v632
        %v637 = vmul.f32 %v621, %v633
        %v638 = vtanh.pop %v634
        %v639 = vtanh.pop %v635
        %v640 = vtanh.pop %v636
        %v641 = vtanh.pop %v637
        %v642 = vadd.f32 %v638, 1.0
        %v643 = vadd.f32 %v639, 1.0
        %v644 = vadd.f32 %v640, 1.0
        %v645 = vadd.f32 %v641, 1.0
        %v646 = vmul.f32 %v614, %v642
        %v647 = vmul.f32 %v615, %v643
        %v648 = vmul.f32 %v616, %v644
        %v649 = vmul.f32 %v617, %v645
        %650 = vst [vmem:[%s232] sm:$0xff] %v646
        %651 = vst [vmem:[%s232 + $0x8] sm:$0xff] %v647
        %652 = vst [vmem:[%s232 + $0x10] sm:$0xff] %v648
        %653 = vst [vmem:[%s232 + $0x18] sm:$0xff] %v649
        %p654 = scmp.lt.s32.totalorder %s16, 1
        %s655 = scalar_select %p654, %s16, 1
        %s656 = smul.addr %s655, 4
        %s657 = smul.addr %s656, 8
        %s658 = scalar_lea.vmem %s4, %s657
        // Predicated region
        $region41: #{_lambda_.3} parent=35 // pred_check
          %p659 = pneg %p128
        $region42: #{_lambda_.3} parent=35 // pred_check_branch
          %661 = sbr.rel (%p659) target = $region44
        $region43: #{_lambda_.3} parent=35 // pred_region
          _
        $region44: #{_lambda_.3} parent=35 // pred_fallthru
          _
      $region36: #{_lambda_.3} parent=5 // pred_fallthru
        _
      %p662 = scmp.le.s32.totalorder 2, %s11
      // Predicated region
      $region45: #{_lambda_.3} parent=5 // pred_check
        %p663 = pneg %p662
      $region46: #{_lambda_.3} parent=5 // pred_check_branch
        %665 = sbr.rel (%p663) target = $region48
      $region47: #{_lambda_.3} parent=5 // pred_region
        %s666 = ssub.s32 %s11, 2
        // Predicated region
        $region49: #{_lambda_.3} parent=47 // pred_check
          %p667 = pneg %p134
        $region50: #{_lambda_.3} parent=47 // pred_check_branch
          %669 = sbr.rel (%p667) target = $region52
        $region51: #{_lambda_.3} parent=47 // pred_region
          %p670 = scmp.lt.s32.totalorder %s17, 1
          %s671 = scalar_select %p670, %s17, 1
          %s672 = smul.addr %s671, 4
          %s673 = smul.addr %s672, 8
          %s674 = scalar_lea.vmem %s4, %s673
        $region52: #{_lambda_.3} parent=47 // pred_fallthru
          _
      $region48: #{_lambda_.3} parent=5 // pred_fallthru
        _
    $region6: #{_lambda_.3} parent=1 // loop_footer
      %s15 = sadd.s32 1, %s11
    $region7: #{_lambda_.3} parent=1 // loop_footer_branch
      %10 = sbr.rel target = $region3
    $region8: #{_lambda_.3} parent=1 // loop_exit
      _
    %675 = vsyncpa [#allocation3], 1
    %s676 = scalar_lea.sflag [#allocation3], 1
    %677 = vsyncpa %s676, 1

// kernel: _lambda_.5
$region0: #{_lambda_.5}
  #allocation0 [shape = 'u32[]', space=smem, size = 0x4, offset = 0x4, fixed_abs, tag = 'smem constant byte address 0x4 - core index']
  #allocation1 [shape = 'u32[144,128]{1,0:T(1,128)}', space=vmem, size = 0x12000, scoped, tag = 'internal scratch']
  %s0 = inlined_call_operand.vmem [shape: f32[2,16,256], index: 0, kind: input, shape index: {}]
  %s1 = inlined_call_operand.vmem [shape: f32[2,16,1], index: 1, kind: input, shape index: {}]
  %s2 = inlined_call_operand.vmem [shape: f32[3,256,256], index: 2, kind: input, shape index: {}]
  %s3 = inlined_call_operand.vmem [shape: f32[1,256], index: 3, kind: input, shape index: {}]
  %s4 = inlined_call_operand.hbm [shape: f32[2,16,256], index: 4, kind: output, shape index: {}]
  %s5 = sld [smem:[#allocation0]]
  $region49: #{_lambda_.5} parent=0
    _
  %s7 = ssub.s32 1, %s5
  %s8 = scalar_select 0, %s7, %s5
  $region1: #{_lambda_.5} parent=0
    #allocation2 [shape = 'u8[32768]{0}', space=vmem, size = 0x8000, scoped, tag = 'output window, operand 0']
    #allocation3 [shape = 's32[2]{0}', space=sflag, size = 0x8, scoped, tag = 'scoped memory for _lambda_.5']
    %9 = vsyncpa [#allocation3], 0
    %s10 = scalar_lea.sflag [#allocation3], 1
    %11 = vsyncpa %s10, 0
    loop: start=0, step=1, limit=4
    $region2: #{_lambda_.5} parent=1 // loop_pre_header
      _
    $region3: #{_lambda_.5} parent=1 // loop_header
      %s13 = sphi 0, %s17
      %p14 = scmp.ge.s32.totalorder %s13, 4
      %s23 = sphi 0, %s25
      %s26 = sphi 0, %s23
      %s27 = sphi 0, %s26
      %s43 = sphi 0, %s27
      %s49 = sphi 0, %s51
      %s52 = sphi 0, %s49
      %s53 = sphi 0, %s52
      %s69 = sphi 0, %s53
      %s73 = sphi 0, %s73
      %s75 = sphi 0, %s73
      %s76 = sphi 0, %s75
      %s90 = sphi 0, %s76
      %s94 = sphi 0, %s94
      %s96 = sphi 0, %s94
      %s97 = sphi 0, %s96
      %s111 = sphi 0, %s97
      %s117 = sphi 0, %s119
      %s120 = sphi 0, %s117
      %s121 = sphi 0, %s120
      %s137 = sphi 0, %s121
    $region4: #{_lambda_.5} parent=1 // loop_header_branch
      %16 = sbr.rel (%p14) target = $region8
    $region5: #{_lambda_.5} parent=1 // loop_body
      %s18 = ssub.s32 %s13, 1
      %s19 = ssub.s32 %s13, 2
      %s20 = sadd.s32 %s13, 1
      %s21 = ssub.s32 %s13, %s20
      %p22 = scmp.eq.s32.totalorder %s21, 0
      %s24 = sadd.s32 %s23, 1
      %s25 = scalar_select %p22, %s23, %s24
      %p28 = pneg %p22
      %p29 = scmp.eq.s32.totalorder %s13, 1
      %p30 = por %p28, %p29
      %p31 = scmp.ne.s32.totalorder %s23, %s26
      %p32 = scmp.eq.s32.totalorder %s13, 0
      %p33 = por %p31, %p32
      %p34 = scmp.ne.s32.totalorder %s23, %s26
      %p35 = scmp.eq.s32.totalorder %s18, 1
      %p36 = por %p34, %p35
      %p37 = scmp.ne.s32.totalorder %s26, %s27
      %p38 = scmp.eq.s32.totalorder %s18, 0
      %p39 = por %p37, %p38
      %p40 = scmp.ne.s32.totalorder %s26, %s27
      %p41 = scmp.eq.s32.totalorder %s19, 1
      %p42 = por %p40, %p41
      %p44 = scmp.ne.s32.totalorder %s27, %s43
      %p45 = scmp.eq.s32.totalorder %s19, 0
      %p46 = por %p44, %p45
      %s47 = ssub.s32 %s13, %s20
      %p48 = scmp.eq.s32.totalorder %s47, 0
      %s50 = sadd.s32 %s49, 1
      %s51 = scalar_select %p48, %s49, %s50
      %p54 = pneg %p48
      %p55 = scmp.eq.s32.totalorder %s13, 1
      %p56 = por %p54, %p55
      %p57 = scmp.ne.s32.totalorder %s49, %s52
      %p58 = scmp.eq.s32.totalorder %s13, 0
      %p59 = por %p57, %p58
      %p60 = scmp.ne.s32.totalorder %s49, %s52
      %p61 = scmp.eq.s32.totalorder %s18, 1
      %p62 = por %p60, %p61
      %p63 = scmp.ne.s32.totalorder %s52, %s53
      %p64 = scmp.eq.s32.totalorder %s18, 0
      %p65 = por %p63, %p64
      %p66 = scmp.ne.s32.totalorder %s52, %s53
      %p67 = scmp.eq.s32.totalorder %s19, 1
      %p68 = por %p66, %p67
      %p70 = scmp.ne.s32.totalorder %s53, %s69
      %p71 = scmp.eq.s32.totalorder %s19, 0
      %p72 = por %p70, %p71
      %s74 = sadd.s32 %s73, 1
      %p77 = scmp.eq.s32.totalorder %s13, 1
      %p78 = scmp.ne.s32.totalorder %s73, %s75
      %p79 = scmp.eq.s32.totalorder %s13, 0
      %p80 = por %p78, %p79
      %p81 = scmp.ne.s32.totalorder %s73, %s75
      %p82 = scmp.eq.s32.totalorder %s18, 1
      %p83 = por %p81, %p82
      %p84 = scmp.ne.s32.totalorder %s75, %s76
      %p85 = scmp.eq.s32.totalorder %s18, 0
      %p86 = por %p84, %p85
      %p87 = scmp.ne.s32.totalorder %s75, %s76
      %p88 = scmp.eq.s32.totalorder %s19, 1
      %p89 = por %p87, %p88
      %p91 = scmp.ne.s32.totalorder %s76, %s90
      %p92 = scmp.eq.s32.totalorder %s19, 0
      %p93 = por %p91, %p92
      %s95 = sadd.s32 %s94, 1
      %p98 = scmp.eq.s32.totalorder %s13, 1
      %p99 = scmp.ne.s32.totalorder %s94, %s96
      %p100 = scmp.eq.s32.totalorder %s13, 0
      %p101 = por %p99, %p100
      %p102 = scmp.ne.s32.totalorder %s94, %s96
      %p103 = scmp.eq.s32.totalorder %s18, 1
      %p104 = por %p102, %p103
      %p105 = scmp.ne.s32.totalorder %s96, %s97
      %p106 = scmp.eq.s32.totalorder %s18, 0
      %p107 = por %p105, %p106
      %p108 = scmp.ne.s32.totalorder %s96, %s97
      %p109 = scmp.eq.s32.totalorder %s19, 1
      %p110 = por %p108, %p109
      %p112 = scmp.ne.s32.totalorder %s97, %s111
      %p113 = scmp.eq.s32.totalorder %s19, 0
      %p114 = por %p112, %p113
      %s115 = ssub.s32 %s13, %s20
      %p116 = scmp.eq.s32.totalorder %s115, 0
      %s118 = sadd.s32 %s117, 1
      %s119 = scalar_select %p116, %s117, %s118
      %p122 = pneg %p116
      %p123 = scmp.eq.s32.totalorder %s13, 1
      %p124 = por %p122, %p123
      %p125 = scmp.ne.s32.totalorder %s117, %s120
      %p126 = scmp.eq.s32.totalorder %s13, 0
      %p127 = por %p125, %p126
      %p128 = scmp.ne.s32.totalorder %s117, %s120
      %p129 = scmp.eq.s32.totalorder %s18, 1
      %p130 = por %p128, %p129
      %p131 = scmp.ne.s32.totalorder %s120, %s121
      %p132 = scmp.eq.s32.totalorder %s18, 0
      %p133 = por %p131, %p132
      %p134 = scmp.ne.s32.totalorder %s120, %s121
      %p135 = scmp.eq.s32.totalorder %s19, 1
      %p136 = por %p134, %p135
      %p138 = scmp.ne.s32.totalorder %s121, %s137
      %p139 = scmp.eq.s32.totalorder %s19, 0
      %p140 = por %p138, %p139
      %p141 = scmp.le.s32.totalorder 1, %s13
      %p142 = scmp.lt.s32.totalorder %s13, 3
      %p143 = pnand %p141, %p142
      %p144 = pneg %p143
      // Predicated region
      $region9: #{_lambda_.5} parent=5 // pred_check
        _
      $region10: #{_lambda_.5} parent=5 // pred_check_branch
        %146 = sbr.rel (%p143) target = $region12
      $region11: #{_lambda_.5} parent=5 // pred_region
        %s147 = ssub.s32 %s13, 1
        // Predicated region
        $region13: #{_lambda_.5} parent=11 // pred_check
          %p148 = pneg %p86
        $region14: #{_lambda_.5} parent=11 // pred_check_branch
          %150 = sbr.rel (%p148) target = $region16
        $region15: #{_lambda_.5} parent=11 // pred_region
          _
        $region16: #{_lambda_.5} parent=11 // pred_fallthru
          _
        // Predicated region
        $region17: #{_lambda_.5} parent=11 // pred_check
          %p151 = pneg %p107
        $region18: #{_lambda_.5} parent=11 // pred_check_branch
          %153 = sbr.rel (%p151) target = $region20
        $region19: #{_lambda_.5} parent=11 // pred_region
          _
        $region20: #{_lambda_.5} parent=11 // pred_fallthru
          _
      $region12: #{_lambda_.5} parent=5 // pred_fallthru
        _
      %p154 = scmp.lt.s32.totalorder %s13, 2
      // Predicated region
      $region21: #{_lambda_.5} parent=5 // pred_check
        %p155 = pneg %p154
      $region22: #{_lambda_.5} parent=5 // pred_check_branch
        %157 = sbr.rel (%p155) target = $region24
      $region23: #{_lambda_.5} parent=5 // pred_region
        // Predicated region
        $region25: #{_lambda_.5} parent=23 // pred_check
          %p158 = pneg %p33
        $region26: #{_lambda_.5} parent=23 // pred_check_branch
          %160 = sbr.rel (%p158) target = $region28
        $region27: #{_lambda_.5} parent=23 // pred_region
          %p161 = scmp.lt.s32.totalorder %s13, 1
          %s162 = scalar_select %p161, %s13, 1
          %s163 = smul.addr %s162, 4
          %s164 = smul.addr %s163, 8
          %s165 = scalar_lea.vmem %s0, %s164
        $region28: #{_lambda_.5} parent=23 // pred_fallthru
          _
        // Predicated region
        $region29: #{_lambda_.5} parent=23 // pred_check
          %p166 = pneg %p59
        $region30: #{_lambda_.5} parent=23 // pred_check_branch
          %168 = sbr.rel (%p166) target = $region32
        $region31: #{_lambda_.5} parent=23 // pred_region
          %p169 = scmp.lt.s32.totalorder %s13, 1
          %s170 = scalar_select %p169, %s13, 1
          %s171 = smul.addr %s170, 2
          %s172 = smul.addr %s171, 8
          %s173 = scalar_lea.vmem %s1, %s172
        $region32: #{_lambda_.5} parent=23 // pred_fallthru
          _
      $region24: #{_lambda_.5} parent=5 // pred_fallthru
        _
      %p174 = scmp.le.s32.totalorder 1, %s13
      %p175 = scmp.lt.s32.totalorder %s13, 3
      %p176 = pnand %p174, %p175
      %p177 = pneg %p176
      // Predicated region
      $region33: #{_lambda_.5} parent=5 // pred_check
        _
      $region34: #{_lambda_.5} parent=5 // pred_check_branch
        %179 = sbr.rel (%p176) target = $region36
      $region35: #{_lambda_.5} parent=5 // pred_region
        %s180 = ssub.s32 %s13, 1
        %p181 = scmp.lt.s32.totalorder %s18, 1
        %s182 = scalar_select %p181, %s18, 1
        %s183 = smul.addr %s182, 4
        %s184 = smul.addr %s183, 8
        %s185 = scalar_lea.vmem %s0, %s184
        %p186 = pneg %p39
        %p187 = pneg %p36
        %p188 = scmp.lt.s32.totalorder %s18, 1
        %s189 = scalar_select %p188, %s18, 1
        %s190 = smul.addr %s189, 2
        %s191 = smul.addr %s190, 8
        %s192 = scalar_lea.vmem %s1, %s191
        %p193 = pneg %p65
        %p194 = pneg %p62
        %p195 = pneg %p86
        %p196 = pneg %p83
        %p197 = pneg %p107
        %p198 = pneg %p104
        %p199 = pneg %p133
        %p200 = pneg %p130
        %s201 = sand.u32 %s120, 1
        %s202 = scalar_lea.sflag [#allocation3], %s201
        %s203 = sand.u32 %s120, 1
        %s204 = smul.addr %s203, 32
        %s205 = scalar_lea.vmem [#allocation2], %s204
        %p206 = scmp.lt.s32.totalorder %s18, 1
        %s207 = scalar_select %p206, %s18, 1
        %s208 = smul.addr %s207, 4
        %s209 = smul.addr %s208, 8
        %s210 = scalar_lea.vmem %s0, %s209
        %p211 = scmp.lt.s32.totalorder %s18, 1
        %s212 = scalar_select %p211, %s18, 1
        %s213 = smul.addr %s212, 2
        %s214 = smul.addr %s213, 8
        %s215 = scalar_lea.vmem %s1, %s214
        %v216 = vld [vmem:[%s210] sm:$0xff]
        %v217 = vld [vmem:[%s210 + $0x8] sm:$0xff]
        %v218 = vld [vmem:[%s210 + $0x10] sm:$0xff]
        %v219 = vld [vmem:[%s210 + $0x18] sm:$0xff]
        %v220 = vld [vmem:[%s215] sm:$0xff]
        %v221 = vld [vmem:[%s215 + $0x8] sm:$0xff]
        %223 = vset.pattern.permute.xlu0 0
        %224 = vperm.xlu0 %223, %v220
        %v225 = vpop.permute.xlu0 %224
        %228 = vset.pattern.permute.xlu0 0
        %229 = vperm.xlu0 %228, %v221
        %v230 = vpop.permute.xlu0 %229
        %v232 = vmul.f32 %v216, %v225
        %v233 = vmul.f32 %v217, %v225
        %v234 = vmul.f32 %v218, %v230
        %v235 = vmul.f32 %v219, %v230
        %s236 = scalar_lea.vmem %s2, 512
        %v237 = vld [vmem:[%s236] sm:$0xff]
        %v238 = vld [vmem:[%s236 + $0x8] sm:$0xff]
        %v239 = vld [vmem:[%s236 + $0x10] sm:$0xff]
        %v240 = vld [vmem:[%s236 + $0x18] sm:$0xff]
        %v241 = vld [vmem:[%s236 + $0x20] sm:$0xff]
        %v242 = vld [vmem:[%s236 + $0x28] sm:$0xff]
        %v243 = vld [vmem:[%s236 + $0x30] sm:$0xff]
        %v244 = vld [vmem:[%s236 + $0x38] sm:$0xff]
        %v245 = vld [vmem:[%s236 + $0x40] sm:$0xff]
        %v246 = vld [vmem:[%s236 + $0x48] sm:$0xff]
        %v247 = vld [vmem:[%s236 + $0x50] sm:$0xff]
        %v248 = vld [vmem:[%s236 + $0x58] sm:$0xff]
        %v249 = vld [vmem:[%s236 + $0x60] sm:$0xff]
        %v250 = vld [vmem:[%s236 + $0x68] sm:$0xff]
        %v251 = vld [vmem:[%s236 + $0x70] sm:$0xff]
        %v252 = vld [vmem:[%s236 + $0x78] sm:$0xff]
        %v253 = vld [vmem:[%s236 + $0x80] sm:$0xff]
        %v254 = vld [vmem:[%s236 + $0x88] sm:$0xff]
        %v255 = vld [vmem:[%s236 + $0x90] sm:$0xff]
        %v256 = vld [vmem:[%s236 + $0x98] sm:$0xff]
        %v257 = vld [vmem:[%s236 + $0xa0] sm:$0xff]
        %v258 = vld [vmem:[%s236 + $0xa8] sm:$0xff]
        %v259 = vld [vmem:[%s236 + $0xb0] sm:$0xff]
        %v260 = vld [vmem:[%s236 + $0xb8] sm:$0xff]
        %v261 = vld [vmem:[%s236 + $0xc0] sm:$0xff]
        %v262 = vld [vmem:[%s236 + $0xc8] sm:$0xff]
        %v263 = vld [vmem:[%s236 + $0xd0] sm:$0xff]
        %v264 = vld [vmem:[%s236 + $0xd8] sm:$0xff]
        %v265 = vld [vmem:[%s236 + $0xe0] sm:$0xff]
        %v266 = vld [vmem:[%s236 + $0xe8] sm:$0xff]
        %v267 = vld [vmem:[%s236 + $0xf0] sm:$0xff]
        %v268 = vld [vmem:[%s236 + $0xf8] sm:$0xff]
        %v269 = vld [vmem:[%s236 + $0x100] sm:$0xff]
        %v270 = vld [vmem:[%s236 + $0x108] sm:$0xff]
        %v271 = vld [vmem:[%s236 + $0x110] sm:$0xff]
        %v272 = vld [vmem:[%s236 + $0x118] sm:$0xff]
        %v273 = vld [vmem:[%s236 + $0x120] sm:$0xff]
        %v274 = vld [vmem:[%s236 + $0x128] sm:$0xff]
        %v275 = vld [vmem:[%s236 + $0x130] sm:$0xff]
        %v276 = vld [vmem:[%s236 + $0x138] sm:$0xff]
        %v277 = vld [vmem:[%s236 + $0x140] sm:$0xff]
        %v278 = vld [vmem:[%s236 + $0x148] sm:$0xff]
        %v279 = vld [vmem:[%s236 + $0x150] sm:$0xff]
        %v280 = vld [vmem:[%s236 + $0x158] sm:$0xff]
        %v281 = vld [vmem:[%s236 + $0x160] sm:$0xff]
        %v282 = vld [vmem:[%s236 + $0x168] sm:$0xff]
        %v283 = vld [vmem:[%s236 + $0x170] sm:$0xff]
        %v284 = vld [vmem:[%s236 + $0x178] sm:$0xff]
        %v285 = vld [vmem:[%s236 + $0x180] sm:$0xff]
        %v286 = vld [vmem:[%s236 + $0x188] sm:$0xff]
        %v287 = vld [vmem:[%s236 + $0x190] sm:$0xff]
        %v288 = vld [vmem:[%s236 + $0x198] sm:$0xff]
        %v289 = vld [vmem:[%s236 + $0x1a0] sm:$0xff]
        %v290 = vld [vmem:[%s236 + $0x1a8] sm:$0xff]
        %v291 = vld [vmem:[%s236 + $0x1b0] sm:$0xff]
        %v292 = vld [vmem:[%s236 + $0x1b8] sm:$0xff]
        %v293 = vld [vmem:[%s236 + $0x1c0] sm:$0xff]
        %v294 = vld [vmem:[%s236 + $0x1c8] sm:$0xff]
        %v295 = vld [vmem:[%s236 + $0x1d0] sm:$0xff]
        %v296 = vld [vmem:[%s236 + $0x1d8] sm:$0xff]
        %v297 = vld [vmem:[%s236 + $0x1e0] sm:$0xff]
        %v298 = vld [vmem:[%s236 + $0x1e8] sm:$0xff]
        %v299 = vld [vmem:[%s236 + $0x1f0] sm:$0xff]
        %v300 = vld [vmem:[%s236 + $0x1f8] sm:$0xff]
        %vm305 = vcmask 1040384
        %v306 = vrot.slane %v232, 7
        %v307 = vrot.slane %v233, 7
        %v308 = vrot.slane %v234, 7
        %v309 = vsel %vm305, %v306, %v308
        %v310 = vrot.slane %v235, 7
        %v311 = vsel %vm305, %v307, %v310
        %v316 = vsel %vm305, 0.0, %v306
        %v317 = vsel %vm305, 0.0, %v307
        %v318 = vld [vmem:[%s2] sm:$0xff]
        %v319 = vld [vmem:[%s2 + $0x8] sm:$0xff]
        %v320 = vld [vmem:[%s2 + $0x10] sm:$0xff]
        %v321 = vld [vmem:[%s2 + $0x18] sm:$0xff]
        %v322 = vld [vmem:[%s2 + $0x20] sm:$0xff]
        %v323 = vld [vmem:[%s2 + $0x28] sm:$0xff]
        %v324 = vld [vmem:[%s2 + $0x30] sm:$0xff]
        %v325 = vld [vmem:[%s2 + $0x38] sm:$0xff]
        %v326 = vld [vmem:[%s2 + $0x40] sm:$0xff]
        %v327 = vld [vmem:[%s2 + $0x48] sm:$0xff]
        %v328 = vld [vmem:[%s2 + $0x50] sm:$0xff]
        %v329 = vld [vmem:[%s2 + $0x58] sm:$0xff]
        %v330 = vld [vmem:[%s2 + $0x60] sm:$0xff]
        %v331 = vld [vmem:[%s2 + $0x68] sm:$0xff]
        %v332 = vld [vmem:[%s2 + $0x70] sm:$0xff]
        %v333 = vld [vmem:[%s2 + $0x78] sm:$0xff]
        %v334 = vld [vmem:[%s2 + $0x80] sm:$0xff]
        %v335 = vld [vmem:[%s2 + $0x88] sm:$0xff]
        %v336 = vld [vmem:[%s2 + $0x90] sm:$0xff]
        %v337 = vld [vmem:[%s2 + $0x98] sm:$0xff]
        %v338 = vld [vmem:[%s2 + $0xa0] sm:$0xff]
        %v339 = vld [vmem:[%s2 + $0xa8] sm:$0xff]
        %v340 = vld [vmem:[%s2 + $0xb0] sm:$0xff]
        %v341 = vld [vmem:[%s2 + $0xb8] sm:$0xff]
        %v342 = vld [vmem:[%s2 + $0xc0] sm:$0xff]
        %v343 = vld [vmem:[%s2 + $0xc8] sm:$0xff]
        %v344 = vld [vmem:[%s2 + $0xd0] sm:$0xff]
        %v345 = vld [vmem:[%s2 + $0xd8] sm:$0xff]
        %v346 = vld [vmem:[%s2 + $0xe0] sm:$0xff]
        %v347 = vld [vmem:[%s2 + $0xe8] sm:$0xff]
        %v348 = vld [vmem:[%s2 + $0xf0] sm:$0xff]
        %v349 = vld [vmem:[%s2 + $0xf8] sm:$0xff]
        %v350 = vld [vmem:[%s2 + $0x100] sm:$0xff]
        %v351 = vld [vmem:[%s2 + $0x108] sm:$0xff]
        %v352 = vld [vmem:[%s2 + $0x110] sm:$0xff]
        %v353 = vld [vmem:[%s2 + $0x118] sm:$0xff]
        %v354 = vld [vmem:[%s2 + $0x120] sm:$0xff]
        %v355 = vld [vmem:[%s2 + $0x128] sm:$0xff]
        %v356 = vld [vmem:[%s2 + $0x130] sm:$0xff]
        %v357 = vld [vmem:[%s2 + $0x138] sm:$0xff]
        %v358 = vld [vmem:[%s2 + $0x140] sm:$0xff]
        %v359 = vld [vmem:[%s2 + $0x148] sm:$0xff]
        %v360 = vld [vmem:[%s2 + $0x150] sm:$0xff]
        %v361 = vld [vmem:[%s2 + $0x158] sm:$0xff]
        %v362 = vld [vmem:[%s2 + $0x160] sm:$0xff]
        %v363 = vld [vmem:[%s2 + $0x168] sm:$0xff]
        %v364 = vld [vmem:[%s2 + $0x170] sm:$0xff]
        %v365 = vld [vmem:[%s2 + $0x178] sm:$0xff]
        %v366 = vld [vmem:[%s2 + $0x180] sm:$0xff]
        %v367 = vld [vmem:[%s2 + $0x188] sm:$0xff]
        %v368 = vld [vmem:[%s2 + $0x190] sm:$0xff]
        %v369 = vld [vmem:[%s2 + $0x198] sm:$0xff]
        %v370 = vld [vmem:[%s2 + $0x1a0] sm:$0xff]
        %v371 = vld [vmem:[%s2 + $0x1a8] sm:$0xff]
        %v372 = vld [vmem:[%s2 + $0x1b0] sm:$0xff]
        %v373 = vld [vmem:[%s2 + $0x1b8] sm:$0xff]
        %v374 = vld [vmem:[%s2 + $0x1c0] sm:$0xff]
        %v375 = vld [vmem:[%s2 + $0x1c8] sm:$0xff]
        %v376 = vld [vmem:[%s2 + $0x1d0] sm:$0xff]
        %v377 = vld [vmem:[%s2 + $0x1d8] sm:$0xff]
        %v378 = vld [vmem:[%s2 + $0x1e0] sm:$0xff]
        %v379 = vld [vmem:[%s2 + $0x1e8] sm:$0xff]
        %v380 = vld [vmem:[%s2 + $0x1f0] sm:$0xff]
        %v381 = vld [vmem:[%s2 + $0x1f8] sm:$0xff]
        %382 = vmatprep.subr.mxu0 %v319
        %383 = vmatpush1.msra.mxu0 %v318
        %384 = vmatprep.subr.mxu0 %v321
        %385 = vmatpush1.msra.mxu0 %v320
        %386 = vmatprep.subr.mxu0 %v323
        %387 = vmatpush1.msra.mxu0 %v322
        %388 = vmatprep.subr.mxu0 %v325
        %389 = vmatpush1.msra.mxu0 %v324
        %390 = vmatprep.subr.mxu0 %v327
        %391 = vmatpush1.msra.mxu0 %v326
        %392 = vmatprep.subr.mxu0 %v329
        %393 = vmatpush1.msra.mxu0 %v328
        %394 = vmatprep.subr.mxu0 %v331
        %395 = vmatpush1.msra.mxu0 %v330
        %396 = vmatprep.subr.mxu0 %v333
        %397 = vmatpush1.msra.mxu0 %v332
        %398 = vmatprep.subr.mxu0 %v335
        %399 = vmatpush1.msra.mxu0 %v334
        %400 = vmatprep.subr.mxu0 %v337
        %401 = vmatpush1.msra.mxu0 %v336
        %402 = vmatprep.subr.mxu0 %v339
        %403 = vmatpush1.msra.mxu0 %v338
        %404 = vmatprep.subr.mxu0 %v341
        %405 = vmatpush1.msra.mxu0 %v340
        %406 = vmatprep.subr.mxu0 %v343
        %407 = vmatpush1.msra.mxu0 %v342
        %408 = vmatprep.subr.mxu0 %v345
        %409 = vmatpush1.msra.mxu0 %v344
        %410 = vmatprep.subr.mxu0 %v347
        %411 = vmatpush1.msra.mxu0 %v346
        %412 = vmatprep.subr.mxu0 %v349
        %413 = vmatpush1.msra.mxu0 %v348
        %414 = vmatprep.subr.mxu0 %v351
        %415 = vmatpush1.msra.mxu0 %v350
        %416 = vmatprep.subr.mxu0 %v353
        %417 = vmatpush1.msra.mxu0 %v352
        %418 = vmatprep.subr.mxu0 %v355
        %419 = vmatpush1.msra.mxu0 %v354
        %420 = vmatprep.subr.mxu0 %v357
        %421 = vmatpush1.msra.mxu0 %v356
        %422 = vmatprep.subr.mxu0 %v359
        %423 = vmatpush1.msra.mxu0 %v358
        %424 = vmatprep.subr.mxu0 %v361
        %425 = vmatpush1.msra.mxu0 %v360
        %426 = vmatprep.subr.mxu0 %v363
        %427 = vmatpush1.msra.mxu0 %v362
        %428 = vmatprep.subr.mxu0 %v365
        %429 = vmatpush1.msra.mxu0 %v364
        %430 = vmatprep.subr.mxu0 %v367
        %431 = vmatpush1.msra.mxu0 %v366
        %432 = vmatprep.subr.mxu0 %v369
        %433 = vmatpush1.msra.mxu0 %v368
        %434 = vmatprep.subr.mxu0 %v371
        %435 = vmatpush1.msra.mxu0 %v370
        %436 = vmatprep.subr.mxu0 %v373
        %437 = vmatpush1.msra.mxu0 %v372
        %438 = vmatprep.subr.mxu0 %v375
        %439 = vmatpush1.msra.mxu0 %v374
        %440 = vmatprep.subr.mxu0 %v377
        %441 = vmatpush1.msra.mxu0 %v376
        %442 = vmatprep.subr.mxu0 %v379
        %443 = vmatpush1.msra.mxu0 %v378
        %444 = vmatprep.subr.mxu0 %v381
        %445 = vmatpush1.msra.mxu0 %v380
        %446 = vmatprep.mubr.f32.mxu0 %v317
        %447 = vmatmul.mubr.f32.gmra.mrb[0].mxu0 %v316
        %v448 = vpop.f32.mrb[0].mxu0
        %v449 = vadd.f32 0.0, %v448
        %v450 = vpop.f32.mrb[0].mxu0
        %v451 = vadd.f32 0.0, %v450
        %452 = vmatprep.mubr.f32.mxu0 %v311
        %453 = vmatmul.mubr.f32.gmra.mrb[0].mxu0 %v309
        %v454 = vpop.f32.mrb[0].mxu0
        %v455 = vadd.f32 0.0, %v454
        %v456 = vpop.f32.mrb[0].mxu0
        %v457 = vadd.f32 0.0, %v456
        %458 = vdwg.mxu0
        %459 = vmatprep.subr.mxu0 %v238
        %460 = vmatpush1.msra.mxu0 %v237
        %461 = vmatprep.subr.mxu0 %v240
        %462 = vmatpush1.msra.mxu0 %v239
        %463 = vmatprep.subr.mxu0 %v242
        %464 = vmatpush1.msra.mxu0 %v241
        %465 = vmatprep.subr.mxu0 %v244
        %466 = vmatpush1.msra.mxu0 %v243
        %467 = vmatprep.subr.mxu0 %v246
        %468 = vmatpush1.msra.mxu0 %v245
        %469 = vmatprep.subr.mxu0 %v248
        %470 = vmatpush1.msra.mxu0 %v247
        %471 = vmatprep.subr.mxu0 %v250
        %472 = vmatpush1.msra.mxu0 %v249
        %473 = vmatprep.subr.mxu0 %v252
        %474 = vmatpush1.msra.mxu0 %v251
        %475 = vmatprep.subr.mxu0 %v254
        %476 = vmatpush1.msra.mxu0 %v253
        %477 = vmatprep.subr.mxu0 %v256
        %478 = vmatpush1.msra.mxu0 %v255
        %479 = vmatprep.subr.mxu0 %v258
        %480 = vmatpush1.msra.mxu0 %v257
        %481 = vmatprep.subr.mxu0 %v260
        %482 = vmatpush1.msra.mxu0 %v259
        %483 = vmatprep.subr.mxu0 %v262
        %484 = vmatpush1.msra.mxu0 %v261
        %485 = vmatprep.subr.mxu0 %v264
        %486 = vmatpush1.msra.mxu0 %v263
        %487 = vmatprep.subr.mxu0 %v266
        %488 = vmatpush1.msra.mxu0 %v265
        %489 = vmatprep.subr.mxu0 %v268
        %490 = vmatpush1.msra.mxu0 %v267
        %491 = vmatprep.subr.mxu0 %v270
        %492 = vmatpush1.msra.mxu0 %v269
        %493 = vmatprep.subr.mxu0 %v272
        %494 = vmatpush1.msra.mxu0 %v271
        %495 = vmatprep.subr.mxu0 %v274
        %496 = vmatpush1.msra.mxu0 %v273
        %497 = vmatprep.subr.mxu0 %v276
        %498 = vmatpush1.msra.mxu0 %v275
        %499 = vmatprep.subr.mxu0 %v278
        %500 = vmatpush1.msra.mxu0 %v277
        %501 = vmatprep.subr.mxu0 %v280
        %502 = vmatpush1.msra.mxu0 %v279
        %503 = vmatprep.subr.mxu0 %v282
        %504 = vmatpush1.msra.mxu0 %v281
        %505 = vmatprep.subr.mxu0 %v284
        %506 = vmatpush1.msra.mxu0 %v283
        %507 = vmatprep.subr.mxu0 %v286
        %508 = vmatpush1.msra.mxu0 %v285
        %509 = vmatprep.subr.mxu0 %v288
        %510 = vmatpush1.msra.mxu0 %v287
        %511 = vmatprep.subr.mxu0 %v290
        %512 = vmatpush1.msra.mxu0 %v289
        %513 = vmatprep.subr.mxu0 %v292
        %514 = vmatpush1.msra.mxu0 %v291
        %515 = vmatprep.subr.mxu0 %v294
        %516 = vmatpush1.msra.mxu0 %v293
        %517 = vmatprep.subr.mxu0 %v296
        %518 = vmatpush1.msra.mxu0 %v295
        %519 = vmatprep.subr.mxu0 %v298
        %520 = vmatpush1.msra.mxu0 %v297
        %521 = vmatprep.subr.mxu0 %v300
        %522 = vmatpush1.msra.mxu0 %v299
        %523 = vmatprep.mubr.f32.mxu0 %v233
        %524 = vmatmul.mubr.f32.gmra.mrb[0].mxu0 %v232
        %v525 = vpop.f32.mrb[0].mxu0
        %v526 = vadd.f32 %v449, %v525
        %v527 = vpop.f32.mrb[0].mxu0
        %v528 = vadd.f32 %v451, %v527
        %529 = vmatprep.mubr.f32.mxu0 %v235
        %530 = vmatmul.mubr.f32.gmra.mrb[0].mxu0 %v234
        %v531 = vpop.f32.mrb[0].mxu0
        %v532 = vadd.f32 %v455, %v531
        %v533 = vpop.f32.mrb[0].mxu0
        %v534 = vadd.f32 %v457, %v533
        %535 = vdwg.mxu0
        %vm536 = vcmask 1046528
        %v537 = vrot.slane %v232, 1
        %v538 = vrot.slane %v234, 1
        %v539 = vsel %vm536, %v537, %v538
        %v540 = vrot.slane %v233, 1
        %v541 = vrot.slane %v235, 1
        %v542 = vsel %vm536, %v540, %v541
        %v547 = vsel %vm536, %v538, 0.0
        %v548 = vsel %vm536, %v541, 0.0
        %s549 = scalar_lea.vmem %s2, 1024
        %v550 = vld [vmem:[%s549] sm:$0xff]
        %v551 = vld [vmem:[%s549 + $0x8] sm:$0xff]
        %v552 = vld [vmem:[%s549 + $0x10] sm:$0xff]
        %v553 = vld [vmem:[%s549 + $0x18] sm:$0xff]
        %v554 = vld [vmem:[%s549 + $0x20] sm:$0xff]
        %v555 = vld [vmem:[%s549 + $0x28] sm:$0xff]
        %v556 = vld [vmem:[%s549 + $0x30] sm:$0xff]
        %v557 = vld [vmem:[%s549 + $0x38] sm:$0xff]
        %v558 = vld [vmem:[%s549 + $0x40] sm:$0xff]
        %v559 = vld [vmem:[%s549 + $0x48] sm:$0xff]
        %v560 = vld [vmem:[%s549 + $0x50] sm:$0xff]
        %v561 = vld [vmem:[%s549 + $0x58] sm:$0xff]
        %v562 = vld [vmem:[%s549 + $0x60] sm:$0xff]
        %v563 = vld [vmem:[%s549 + $0x68] sm:$0xff]
        %v564 = vld [vmem:[%s549 + $0x70] sm:$0xff]
        %v565 = vld [vmem:[%s549 + $0x78] sm:$0xff]
        %v566 = vld [vmem:[%s549 + $0x80] sm:$0xff]
        %v567 = vld [vmem:[%s549 + $0x88] sm:$0xff]
        %v568 = vld [vmem:[%s549 + $0x90] sm:$0xff]
        %v569 = vld [vmem:[%s549 + $0x98] sm:$0xff]
        %v570 = vld [vmem:[%s549 + $0xa0] sm:$0xff]
        %v571 = vld [vmem:[%s549 + $0xa8] sm:$0xff]
        %v572 = vld [vmem:[%s549 + $0xb0] sm:$0xff]
        %v573 = vld [vmem:[%s549 + $0xb8] sm:$0xff]
        %v574 = vld [vmem:[%s549 + $0xc0] sm:$0xff]
        %v575 = vld [vmem:[%s549 + $0xc8] sm:$0xff]
        %v576 = vld [vmem:[%s549 + $0xd0] sm:$0xff]
        %v577 = vld [vmem:[%s549 + $0xd8] sm:$0xff]
        %v578 = vld [vmem:[%s549 + $0xe0] sm:$0xff]
        %v579 = vld [vmem:[%s549 + $0xe8] sm:$0xff]
        %v580 = vld [vmem:[%s549 + $0xf0] sm:$0xff]
        %v581 = vld [vmem:[%s549 + $0xf8] sm:$0xff]
        %v582 = vld [vmem:[%s549 + $0x100] sm:$0xff]
        %v583 = vld [vmem:[%s549 + $0x108] sm:$0xff]
        %v584 = vld [vmem:[%s549 + $0x110] sm:$0xff]
        %v585 = vld [vmem:[%s549 + $0x118] sm:$0xff]
        %v586 = vld [vmem:[%s549 + $0x120] sm:$0xff]
        %v587 = vld [vmem:[%s549 + $0x128] sm:$0xff]
        %v588 = vld [vmem:[%s549 + $0x130] sm:$0xff]
        %v589 = vld [vmem:[%s549 + $0x138] sm:$0xff]
        %v590 = vld [vmem:[%s549 + $0x140] sm:$0xff]
        %v591 = vld [vmem:[%s549 + $0x148] sm:$0xff]
        %v592 = vld [vmem:[%s549 + $0x150] sm:$0xff]
        %v593 = vld [vmem:[%s549 + $0x158] sm:$0xff]
        %v594 = vld [vmem:[%s549 + $0x160] sm:$0xff]
        %v595 = vld [vmem:[%s549 + $0x168] sm:$0xff]
        %v596 = vld [vmem:[%s549 + $0x170] sm:$0xff]
        %v597 = vld [vmem:[%s549 + $0x178] sm:$0xff]
        %v598 = vld [vmem:[%s549 + $0x180] sm:$0xff]
        %v599 = vld [vmem:[%s549 + $0x188] sm:$0xff]
        %v600 = vld [vmem:[%s549 + $0x190] sm:$0xff]
        %v601 = vld [vmem:[%s549 + $0x198] sm:$0xff]
        %v602 = vld [vmem:[%s549 + $0x1a0] sm:$0xff]
        %v603 = vld [vmem:[%s549 + $0x1a8] sm:$0xff]
        %v604 = vld [vmem:[%s549 + $0x1b0] sm:$0xff]
        %v605 = vld [vmem:[%s549 + $0x1b8] sm:$0xff]
        %v606 = vld [vmem:[%s549 + $0x1c0] sm:$0xff]
        %v607 = vld [vmem:[%s549 + $0x1c8] sm:$0xff]
        %v608 = vld [vmem:[%s549 + $0x1d0] sm:$0xff]
        %v609 = vld [vmem:[%s549 + $0x1d8] sm:$0xff]
        %v610 = vld [vmem:[%s549 + $0x1e0] sm:$0xff]
        %v611 = vld [vmem:[%s549 + $0x1e8] sm:$0xff]
        %v612 = vld [vmem:[%s549 + $0x1f0] sm:$0xff]
        %v613 = vld [vmem:[%s549 + $0x1f8] sm:$0xff]
        %614 = vmatprep.subr.mxu0 %v551
        %615 = vmatpush1.msra.mxu0 %v550
        %616 = vmatprep.subr.mxu0 %v553
        %617 = vmatpush1.msra.mxu0 %v552
        %618 = vmatprep.subr.mxu0 %v555
        %619 = vmatpush1.msra.mxu0 %v554
        %620 = vmatprep.subr.mxu0 %v557
        %621 = vmatpush1.msra.mxu0 %v556
        %622 = vmatprep.subr.mxu0 %v559
        %623 = vmatpush1.msra.mxu0 %v558
        %624 = vmatprep.subr.mxu0 %v561
        %625 = vmatpush1.msra.mxu0 %v560
        %626 = vmatprep.subr.mxu0 %v563
        %627 = vmatpush1.msra.mxu0 %v562
        %628 = vmatprep.subr.mxu0 %v565
        %629 = vmatpush1.msra.mxu0 %v564
        %630 = vmatprep.subr.mxu0 %v567
        %631 = vmatpush1.msra.mxu0 %v566
        %632 = vmatprep.subr.mxu0 %v569
        %633 = vmatpush1.msra.mxu0 %v568
        %634 = vmatprep.subr.mxu0 %v571
        %635 = vmatpush1.msra.mxu0 %v570
        %636 = vmatprep.subr.mxu0 %v573
        %637 = vmatpush1.msra.mxu0 %v572
        %638 = vmatprep.subr.mxu0 %v575
        %639 = vmatpush1.msra.mxu0 %v574
        %640 = vmatprep.subr.mxu0 %v577
        %641 = vmatpush1.msra.mxu0 %v576
        %642 = vmatprep.subr.mxu0 %v579
        %643 = vmatpush1.msra.mxu0 %v578
        %644 = vmatprep.subr.mxu0 %v581
        %645 = vmatpush1.msra.mxu0 %v580
        %646 = vmatprep.subr.mxu0 %v583
        %647 = vmatpush1.msra.mxu0 %v582
        %648 = vmatprep.subr.mxu0 %v585
        %649 = vmatpush1.msra.mxu0 %v584
        %650 = vmatprep.subr.mxu0 %v587
        %651 = vmatpush1.msra.mxu0 %v586
        %652 = vmatprep.subr.mxu0 %v589
        %653 = vmatpush1.msra.mxu0 %v588
        %654 = vmatprep.subr.mxu0 %v591
        %655 = vmatpush1.msra.mxu0 %v590
        %656 = vmatprep.subr.mxu0 %v593
        %657 = vmatpush1.msra.mxu0 %v592
        %658 = vmatprep.subr.mxu0 %v595
        %659 = vmatpush1.msra.mxu0 %v594
        %660 = vmatprep.subr.mxu0 %v597
        %661 = vmatpush1.msra.mxu0 %v596
        %662 = vmatprep.subr.mxu0 %v599
        %663 = vmatpush1.msra.mxu0 %v598
        %664 = vmatprep.subr.mxu0 %v601
        %665 = vmatpush1.msra.mxu0 %v600
        %666 = vmatprep.subr.mxu0 %v603
        %667 = vmatpush1.msra.mxu0 %v602
        %668 = vmatprep.subr.mxu0 %v605
        %669 = vmatpush1.msra.mxu0 %v604
        %670 = vmatprep.subr.mxu0 %v607
        %671 = vmatpush1.msra.mxu0 %v606
        %672 = vmatprep.subr.mxu0 %v609
        %673 = vmatpush1.msra.mxu0 %v608
        %674 = vmatprep.subr.mxu0 %v611
        %675 = vmatpush1.msra.mxu0 %v610
        %676 = vmatprep.subr.mxu0 %v613
        %677 = vmatpush1.msra.mxu0 %v612
        %678 = vmatprep.mubr.f32.mxu0 %v542
        %679 = vmatmul.mubr.f32.gmra.mrb[0].mxu0 %v539
        %v680 = vpop.f32.mrb[0].mxu0
        %v681 = vadd.f32 0.0, %v680
        %v682 = vpop.f32.mrb[0].mxu0
        %v683 = vadd.f32 0.0, %v682
        %684 = vmatprep.mubr.f32.mxu0 %v548
        %685 = vmatmul.mubr.f32.gmra.mrb[0].mxu0 %v547
        %v686 = vpop.f32.mrb[0].mxu0
        %v687 = vadd.f32 0.0, %v686
        %v688 = vpop.f32.mrb[0].mxu0
        %v689 = vadd.f32 0.0, %v688
        %690 = vdwg.mxu0
        %v691 = vadd.f32 %v526, %v681
        %v692 = vadd.f32 %v528, %v683
        %v693 = vadd.f32 %v532, %v687
        %v694 = vadd.f32 %v534, %v689
        %v695 = vld [vmem:[%s3] sm:$0x3]
        %v697 = vlaneseq
        %v698 = vshrl.u32 %v697, 7
        %v699 = vsub.s32 0, %v698
        %v700 = vrot.slane %v695, %v699
        %v701 = vlaneseq
        %v702 = vshrl.u32 %v701, 7
        %v703 = vsub.s32 1, %v702
        %v704 = vrot.slane %v695, %v703
        %v707 = vadd.f32 %v691, %v700
        %v708 = vadd.f32 %v692, %v704
        %v709 = vadd.f32 %v693, %v700
        %v710 = vadd.f32 %v694, %v704
        %v711 = vmul.f32 %v707, 0.5
        %v712 = vmul.f32 %v708, 0.5
        %v713 = vmul.f32 %v709, 0.5
        %v714 = vmul.f32 %v710, 0.5
        %v715 = vmul.f32 %v707, 0.7978846
        %v716 = vmul.f32 %v708, 0.7978846
        %v717 = vmul.f32 %v709, 0.7978846
        %v718 = vmul.f32 %v710, 0.7978846
        %v719 = vmul.f32 %v707, 0.044715
        %v720 = vmul.f32 %v708, 0.044715
        %v721 = vmul.f32 %v709, 0.044715
        %v722 = vmul.f32 %v710, 0.044715
        %v723 = vmul.f32 %v719, %v707
        %v724 = vmul.f32 %v720, %v708
        %v725 = vmul.f32 %v721, %v709
        %v726 = vmul.f32 %v722, %v710
        %v727 = vadd.f32 %v723, 1.0
        %v728 = vadd.f32 %v724, 1.0
        %v729 = vadd.f32 %v725, 1.0
        %v730 = vadd.f32 %v726, 1.0
        %v731 = vmul.f32 %v715, %v727
        %v732 = vmul.f32 %v716, %v728
        %v733 = vmul.f32 %v717, %v729
        %v734 = vmul.f32 %v718, %v730
        %v735 = vtanh.pop %v731
        %v736 = vtanh.pop %v732
        %v737 = vtanh.pop %v733
        %v738 = vtanh.pop %v734
        %v739 = vadd.f32 %v735, 1.0
        %v740 = vadd.f32 %v736, 1.0
        %v741 = vadd.f32 %v737, 1.0
        %v742 = vadd.f32 %v738, 1.0
        %v743 = vmul.f32 %v711, %v739
        %v744 = vmul.f32 %v712, %v740
        %v745 = vmul.f32 %v713, %v741
        %v746 = vmul.f32 %v714, %v742
        %747 = vst [vmem:[%s205] sm:$0xff] %v743
        %748 = vst [vmem:[%s205 + $0x8] sm:$0xff] %v744
        %749 = vst [vmem:[%s205 + $0x10] sm:$0xff] %v745
        %750 = vst [vmem:[%s205 + $0x18] sm:$0xff] %v746
        %s751 = sand.u32 %s120, 1
        %s752 = scalar_lea.sflag [#allocation3], %s751
        %s753 = sand.u32 %s120, 1
        %s754 = smul.addr %s753, 32
        %s755 = scalar_lea.vmem [#allocation2], %s754
        // Predicated region
        $region37: #{_lambda_.5} parent=35 // pred_check
          %p756 = pneg %p130
        $region38: #{_lambda_.5} parent=35 // pred_check_branch
          %758 = sbr.rel (%p756) target = $region40
        $region39: #{_lambda_.5} parent=35 // pred_region
          %s760 = ssub.s32 512, 512
          %761 = vsyncadd %s752, %s760
          %s762 = smul.addr %s18, 4
          %s763 = smul.addr %s762, 128
          %s764 = scalar_lea.hbm %s4, %s763
          %s765 = sshll.u32 %s755, 4
          %s766 = int_to_ptr.vmem [resolvable:$true] %s765
          %771 = dma.vmem_to_hbm [thread:$0]  %s766, 512, %s764, %s752, 256, 256, 16
        $region40: #{_lambda_.5} parent=35 // pred_fallthru
          _
      $region36: #{_lambda_.5} parent=5 // pred_fallthru
        _
      %p772 = scmp.le.s32.totalorder 2, %s13
      // Predicated region
      $region41: #{_lambda_.5} parent=5 // pred_check
        %p773 = pneg %p772
      $region42: #{_lambda_.5} parent=5 // pred_check_branch
        %775 = sbr.rel (%p773) target = $region44
      $region43: #{_lambda_.5} parent=5 // pred_region
        %s776 = ssub.s32 %s13, 2
        // Predicated region
        $region45: #{_lambda_.5} parent=43 // pred_check
          %p777 = pneg %p136
        $region46: #{_lambda_.5} parent=43 // pred_check_branch
          %779 = sbr.rel (%p777) target = $region48
        $region47: #{_lambda_.5} parent=43 // pred_region
          %s780 = sand.u32 %s121, 1
          %s781 = scalar_lea.sflag [#allocation3], %s780
          %s782 = sand.u32 %s121, 1
          %s783 = smul.addr %s782, 32
          %s784 = scalar_lea.vmem [#allocation2], %s783
          %785 = dma.done %s781, 512
        $region48: #{_lambda_.5} parent=43 // pred_fallthru
          _
      $region44: #{_lambda_.5} parent=5 // pred_fallthru
        _
    $region6: #{_lambda_.5} parent=1 // loop_footer
      %s17 = sadd.s32 1, %s13
    $region7: #{_lambda_.5} parent=1 // loop_footer_branch
      %12 = sbr.rel target = $region3
    $region8: #{_lambda_.5} parent=1 // loop_exit
      _
    %786 = vsyncpa [#allocation3], 1
    %s787 = scalar_lea.sflag [#allocation3], 1
    %788 = vsyncpa %s787, 1

// kernel: _lambda_.4
$region0: #{_lambda_.4}
  #allocation0 [shape = 'u32[]', space=smem, size = 0x4, offset = 0x4, fixed_abs, tag = 'smem constant byte address 0x4 - core index']
  #allocation1 [shape = 'u32[144,128]{1,0:T(1,128)}', space=vmem, size = 0x12000, scoped, tag = 'internal scratch']
  %s0 = inlined_call_operand.vmem [shape: f32[2,16,256], index: 0, kind: input, shape index: {}]
  %s1 = inlined_call_operand.vmem [shape: f32[2,16,1], index: 1, kind: input, shape index: {}]
  %s2 = inlined_call_operand.hbm [shape: f32[3,256,256], index: 2, kind: input, shape index: {}]
  %s3 = inlined_call_operand.vmem [shape: f32[1,256], index: 3, kind: input, shape index: {}]
  %s4 = inlined_call_operand.vmem [shape: f32[2,16,256], index: 4, kind: output, shape index: {}]
  %s5 = sld [smem:[#allocation0]]
  $region53: #{_lambda_.4} parent=0
    _
  %s7 = ssub.s32 1, %s5
  %s8 = scalar_select 0, %s7, %s5
  $region1: #{_lambda_.4} parent=0
    #allocation2 [shape = 'u8[786432]{0}', space=vmem, size = 0xc0000, scoped, tag = 'input window, operand 2, single buffered']
    #allocation3 [shape = 's32[2]{0}', space=sflag, size = 0x8, scoped, tag = 'scoped memory for _lambda_.4']
    %9 = vsyncpa [#allocation3], 0
    loop: start=0, step=1, limit=4
    $region2: #{_lambda_.4} parent=1 // loop_pre_header
      _
    $region3: #{_lambda_.4} parent=1 // loop_header
      %s11 = sphi 0, %s15
      %p12 = scmp.ge.s32.totalorder %s11, 4
      %s21 = sphi 0, %s23
      %s24 = sphi 0, %s21
      %s25 = sphi 0, %s24
      %s41 = sphi 0, %s25
      %s47 = sphi 0, %s49
      %s50 = sphi 0, %s47
      %s51 = sphi 0, %s50
      %s67 = sphi 0, %s51
      %s71 = sphi 0, %s71
      %s73 = sphi 0, %s71
      %s74 = sphi 0, %s73
      %s88 = sphi 0, %s74
      %s92 = sphi 0, %s92
      %s94 = sphi 0, %s92
      %s95 = sphi 0, %s94
      %s109 = sphi 0, %s95
      %s115 = sphi 0, %s117
      %s118 = sphi 0, %s115
      %s119 = sphi 0, %s118
      %s135 = sphi 0, %s119
    $region4: #{_lambda_.4} parent=1 // loop_header_branch
      %14 = sbr.rel (%p12) target = $region8
    $region5: #{_lambda_.4} parent=1 // loop_body
      %s16 = ssub.s32 %s11, 1
      %s17 = ssub.s32 %s11, 2
      %s18 = sadd.s32 %s11, 1
      %s19 = ssub.s32 %s11, %s18
      %p20 = scmp.eq.s32.totalorder %s19, 0
      %s22 = sadd.s32 %s21, 1
      %s23 = scalar_select %p20, %s21, %s22
      %p26 = pneg %p20
      %p27 = scmp.eq.s32.totalorder %s11, 1
      %p28 = por %p26, %p27
      %p29 = scmp.ne.s32.totalorder %s21, %s24
      %p30 = scmp.eq.s32.totalorder %s11, 0
      %p31 = por %p29, %p30
      %p32 = scmp.ne.s32.totalorder %s21, %s24
      %p33 = scmp.eq.s32.totalorder %s16, 1
      %p34 = por %p32, %p33
      %p35 = scmp.ne.s32.totalorder %s24, %s25
      %p36 = scmp.eq.s32.totalorder %s16, 0
      %p37 = por %p35, %p36
      %p38 = scmp.ne.s32.totalorder %s24, %s25
      %p39 = scmp.eq.s32.totalorder %s17, 1
      %p40 = por %p38, %p39
      %p42 = scmp.ne.s32.totalorder %s25, %s41
      %p43 = scmp.eq.s32.totalorder %s17, 0
      %p44 = por %p42, %p43
      %s45 = ssub.s32 %s11, %s18
      %p46 = scmp.eq.s32.totalorder %s45, 0
      %s48 = sadd.s32 %s47, 1
      %s49 = scalar_select %p46, %s47, %s48
      %p52 = pneg %p46
      %p53 = scmp.eq.s32.totalorder %s11, 1
      %p54 = por %p52, %p53
      %p55 = scmp.ne.s32.totalorder %s47, %s50
      %p56 = scmp.eq.s32.totalorder %s11, 0
      %p57 = por %p55, %p56
      %p58 = scmp.ne.s32.totalorder %s47, %s50
      %p59 = scmp.eq.s32.totalorder %s16, 1
      %p60 = por %p58, %p59
      %p61 = scmp.ne.s32.totalorder %s50, %s51
      %p62 = scmp.eq.s32.totalorder %s16, 0
      %p63 = por %p61, %p62
      %p64 = scmp.ne.s32.totalorder %s50, %s51
      %p65 = scmp.eq.s32.totalorder %s17, 1
      %p66 = por %p64, %p65
      %p68 = scmp.ne.s32.totalorder %s51, %s67
      %p69 = scmp.eq.s32.totalorder %s17, 0
      %p70 = por %p68, %p69
      %s72 = sadd.s32 %s71, 1
      %p75 = scmp.eq.s32.totalorder %s11, 1
      %p76 = scmp.ne.s32.totalorder %s71, %s73
      %p77 = scmp.eq.s32.totalorder %s11, 0
      %p78 = por %p76, %p77
      %p79 = scmp.ne.s32.totalorder %s71, %s73
      %p80 = scmp.eq.s32.totalorder %s16, 1
      %p81 = por %p79, %p80
      %p82 = scmp.ne.s32.totalorder %s73, %s74
      %p83 = scmp.eq.s32.totalorder %s16, 0
      %p84 = por %p82, %p83
      %p85 = scmp.ne.s32.totalorder %s73, %s74
      %p86 = scmp.eq.s32.totalorder %s17, 1
      %p87 = por %p85, %p86
      %p89 = scmp.ne.s32.totalorder %s74, %s88
      %p90 = scmp.eq.s32.totalorder %s17, 0
      %p91 = por %p89, %p90
      %s93 = sadd.s32 %s92, 1
      %p96 = scmp.eq.s32.totalorder %s11, 1
      %p97 = scmp.ne.s32.totalorder %s92, %s94
      %p98 = scmp.eq.s32.totalorder %s11, 0
      %p99 = por %p97, %p98
      %p100 = scmp.ne.s32.totalorder %s92, %s94
      %p101 = scmp.eq.s32.totalorder %s16, 1
      %p102 = por %p100, %p101
      %p103 = scmp.ne.s32.totalorder %s94, %s95
      %p104 = scmp.eq.s32.totalorder %s16, 0
      %p105 = por %p103, %p104
      %p106 = scmp.ne.s32.totalorder %s94, %s95
      %p107 = scmp.eq.s32.totalorder %s17, 1
      %p108 = por %p106, %p107
      %p110 = scmp.ne.s32.totalorder %s95, %s109
      %p111 = scmp.eq.s32.totalorder %s17, 0
      %p112 = por %p110, %p111
      %s113 = ssub.s32 %s11, %s18
      %p114 = scmp.eq.s32.totalorder %s113, 0
      %s116 = sadd.s32 %s115, 1
      %s117 = scalar_select %p114, %s115, %s116
      %p120 = pneg %p114
      %p121 = scmp.eq.s32.totalorder %s11, 1
      %p122 = por %p120, %p121
      %p123 = scmp.ne.s32.totalorder %s115, %s118
      %p124 = scmp.eq.s32.totalorder %s11, 0
      %p125 = por %p123, %p124
      %p126 = scmp.ne.s32.totalorder %s115, %s118
      %p127 = scmp.eq.s32.totalorder %s16, 1
      %p128 = por %p126, %p127
      %p129 = scmp.ne.s32.totalorder %s118, %s119
      %p130 = scmp.eq.s32.totalorder %s16, 0
      %p131 = por %p129, %p130
      %p132 = scmp.ne.s32.totalorder %s118, %s119
      %p133 = scmp.eq.s32.totalorder %s17, 1
      %p134 = por %p132, %p133
      %p136 = scmp.ne.s32.totalorder %s119, %s135
      %p137 = scmp.eq.s32.totalorder %s17, 0
      %p138 = por %p136, %p137
      %p139 = scmp.le.s32.totalorder 1, %s11
      %p140 = scmp.lt.s32.totalorder %s11, 3
      %p141 = pnand %p139, %p140
      %p142 = pneg %p141
      // Predicated region
      $region9: #{_lambda_.4} parent=5 // pred_check
        _
      $region10: #{_lambda_.4} parent=5 // pred_check_branch
        %144 = sbr.rel (%p141) target = $region12
      $region11: #{_lambda_.4} parent=5 // pred_region
        %s145 = ssub.s32 %s11, 1
        // Predicated region
        $region13: #{_lambda_.4} parent=11 // pred_check
          %p146 = pneg %p84
        $region14: #{_lambda_.4} parent=11 // pred_check_branch
          %148 = sbr.rel (%p146) target = $region16
        $region15: #{_lambda_.4} parent=11 // pred_region
          %s150 = ssub.s32 24576, 24576
          %151 = vsyncadd [#allocation3], %s150
          %s152 = sshll.u32 [#allocation2], 4
          %s153 = int_to_ptr.vmem [resolvable:$true] %s152
          %158 = dma.hbm_to_vmem [thread:$0]  %s2, 24576, %s153, [#allocation3], 256, 256, 16
        $region16: #{_lambda_.4} parent=11 // pred_fallthru
          _
        // Predicated region
        $region17: #{_lambda_.4} parent=11 // pred_check
          %p159 = pneg %p105
        $region18: #{_lambda_.4} parent=11 // pred_check_branch
          %161 = sbr.rel (%p159) target = $region20
        $region19: #{_lambda_.4} parent=11 // pred_region
          _
        $region20: #{_lambda_.4} parent=11 // pred_fallthru
          _
      $region12: #{_lambda_.4} parent=5 // pred_fallthru
        _
      %p162 = scmp.lt.s32.totalorder %s11, 2
      // Predicated region
      $region21: #{_lambda_.4} parent=5 // pred_check
        %p163 = pneg %p162
      $region22: #{_lambda_.4} parent=5 // pred_check_branch
        %165 = sbr.rel (%p163) target = $region24
      $region23: #{_lambda_.4} parent=5 // pred_region
        // Predicated region
        $region25: #{_lambda_.4} parent=23 // pred_check
          %p166 = pneg %p31
        $region26: #{_lambda_.4} parent=23 // pred_check_branch
          %168 = sbr.rel (%p166) target = $region28
        $region27: #{_lambda_.4} parent=23 // pred_region
          %p169 = scmp.lt.s32.totalorder %s11, 1
          %s170 = scalar_select %p169, %s11, 1
          %s171 = smul.addr %s170, 4
          %s172 = smul.addr %s171, 8
          %s173 = scalar_lea.vmem %s0, %s172
        $region28: #{_lambda_.4} parent=23 // pred_fallthru
          _
        // Predicated region
        $region29: #{_lambda_.4} parent=23 // pred_check
          %p174 = pneg %p57
        $region30: #{_lambda_.4} parent=23 // pred_check_branch
          %176 = sbr.rel (%p174) target = $region32
        $region31: #{_lambda_.4} parent=23 // pred_region
          %p177 = scmp.lt.s32.totalorder %s11, 1
          %s178 = scalar_select %p177, %s11, 1
          %s179 = smul.addr %s178, 2
          %s180 = smul.addr %s179, 8
          %s181 = scalar_lea.vmem %s1, %s180
        $region32: #{_lambda_.4} parent=23 // pred_fallthru
          _
      $region24: #{_lambda_.4} parent=5 // pred_fallthru
        _
      %p182 = scmp.le.s32.totalorder 1, %s11
      %p183 = scmp.lt.s32.totalorder %s11, 3
      %p184 = pnand %p182, %p183
      %p185 = pneg %p184
      // Predicated region
      $region33: #{_lambda_.4} parent=5 // pred_check
        _
      $region34: #{_lambda_.4} parent=5 // pred_check_branch
        %187 = sbr.rel (%p184) target = $region36
      $region35: #{_lambda_.4} parent=5 // pred_region
        %s188 = ssub.s32 %s11, 1
        // Predicated region
        $region37: #{_lambda_.4} parent=35 // pred_check
          %p189 = pneg %p84
        $region38: #{_lambda_.4} parent=35 // pred_check_branch
          %191 = sbr.rel (%p189) target = $region40
        $region39: #{_lambda_.4} parent=35 // pred_region
          %192 = dma.done [#allocation3], 24576
        $region40: #{_lambda_.4} parent=35 // pred_fallthru
          _
        %p193 = scmp.lt.s32.totalorder %s16, 1
        %s194 = scalar_select %p193, %s16, 1
        %s195 = smul.addr %s194, 4
        %s196 = smul.addr %s195, 8
        %s197 = scalar_lea.vmem %s0, %s196
        %p198 = pneg %p37
        %p199 = pneg %p34
        %p200 = scmp.lt.s32.totalorder %s16, 1
        %s201 = scalar_select %p200, %s16, 1
        %s202 = smul.addr %s201, 2
        %s203 = smul.addr %s202, 8
        %s204 = scalar_lea.vmem %s1, %s203
        %p205 = pneg %p63
        %p206 = pneg %p60
        %p207 = pneg %p84
        %p208 = pneg %p81
        %p209 = pneg %p105
        %p210 = pneg %p102
        %p211 = pneg %p131
        %p212 = pneg %p128
        %p213 = scmp.lt.s32.totalorder %s16, 1
        %s214 = scalar_select %p213, %s16, 1
        %s215 = smul.addr %s214, 4
        %s216 = smul.addr %s215, 8
        %s217 = scalar_lea.vmem %s4, %s216
        %p218 = scmp.lt.s32.totalorder %s16, 1
        %s219 = scalar_select %p218, %s16, 1
        %s220 = smul.addr %s219, 4
        %s221 = smul.addr %s220, 8
        %s222 = scalar_lea.vmem %s0, %s221
        %p223 = scmp.lt.s32.totalorder %s16, 1
        %s224 = scalar_select %p223, %s16, 1
        %s225 = smul.addr %s224, 2
        %s226 = smul.addr %s225, 8
        %s227 = scalar_lea.vmem %s1, %s226
        %p228 = scmp.lt.s32.totalorder %s16, 1
        %s229 = scalar_select %p228, %s16, 1
        %s230 = smul.addr %s229, 4
        %s231 = smul.addr %s230, 8
        %s232 = scalar_lea.vmem %s4, %s231
        %v233 = vld [vmem:[%s222] sm:$0xff]
        %v234 = vld [vmem:[%s222 + $0x8] sm:$0xff]
        %v235 = vld [vmem:[%s222 + $0x10] sm:$0xff]
        %v236 = vld [vmem:[%s222 + $0x18] sm:$0xff]
        %v237 = vld [vmem:[%s227] sm:$0xff]
        %v238 = vld [vmem:[%s227 + $0x8] sm:$0xff]
        %240 = vset.pattern.permute.xlu0 0
        %241 = vperm.xlu0 %240, %v237
        %v242 = vpop.permute.xlu0 %241
        %245 = vset.pattern.permute.xlu0 0
        %246 = vperm.xlu0 %245, %v238
        %v247 = vpop.permute.xlu0 %246
        %v249 = vmul.f32 %v233, %v242
        %v250 = vmul.f32 %v234, %v242
        %v251 = vmul.f32 %v235, %v247
        %v252 = vmul.f32 %v236, %v247
        %s253 = scalar_lea.vmem [#allocation2], 512
        %v254 = vld [vmem:[%s253] sm:$0xff]
        %v255 = vld [vmem:[%s253 + $0x8] sm:$0xff]
        %v256 = vld [vmem:[%s253 + $0x10] sm:$0xff]
        %v257 = vld [vmem:[%s253 + $0x18] sm:$0xff]
        %v258 = vld [vmem:[%s253 + $0x20] sm:$0xff]
        %v259 = vld [vmem:[%s253 + $0x28] sm:$0xff]
        %v260 = vld [vmem:[%s253 + $0x30] sm:$0xff]
        %v261 = vld [vmem:[%s253 + $0x38] sm:$0xff]
        %v262 = vld [vmem:[%s253 + $0x40] sm:$0xff]
        %v263 = vld [vmem:[%s253 + $0x48] sm:$0xff]
        %v264 = vld [vmem:[%s253 + $0x50] sm:$0xff]
        %v265 = vld [vmem:[%s253 + $0x58] sm:$0xff]
        %v266 = vld [vmem:[%s253 + $0x60] sm:$0xff]
        %v267 = vld [vmem:[%s253 + $0x68] sm:$0xff]
        %v268 = vld [vmem:[%s253 + $0x70] sm:$0xff]
        %v269 = vld [vmem:[%s253 + $0x78] sm:$0xff]
        %v270 = vld [vmem:[%s253 + $0x80] sm:$0xff]
        %v271 = vld [vmem:[%s253 + $0x88] sm:$0xff]
        %v272 = vld [vmem:[%s253 + $0x90] sm:$0xff]
        %v273 = vld [vmem:[%s253 + $0x98] sm:$0xff]
        %v274 = vld [vmem:[%s253 + $0xa0] sm:$0xff]
        %v275 = vld [vmem:[%s253 + $0xa8] sm:$0xff]
        %v276 = vld [vmem:[%s253 + $0xb0] sm:$0xff]
        %v277 = vld [vmem:[%s253 + $0xb8] sm:$0xff]
        %v278 = vld [vmem:[%s253 + $0xc0] sm:$0xff]
        %v279 = vld [vmem:[%s253 + $0xc8] sm:$0xff]
        %v280 = vld [vmem:[%s253 + $0xd0] sm:$0xff]
        %v281 = vld [vmem:[%s253 + $0xd8] sm:$0xff]
        %v282 = vld [vmem:[%s253 + $0xe0] sm:$0xff]
        %v283 = vld [vmem:[%s253 + $0xe8] sm:$0xff]
        %v284 = vld [vmem:[%s253 + $0xf0] sm:$0xff]
        %v285 = vld [vmem:[%s253 + $0xf8] sm:$0xff]
        %v286 = vld [vmem:[%s253 + $0x100] sm:$0xff]
        %v287 = vld [vmem:[%s253 + $0x108] sm:$0xff]
        %v288 = vld [vmem:[%s253 + $0x110] sm:$0xff]
        %v289 = vld [vmem:[%s253 + $0x118] sm:$0xff]
        %v290 = vld [vmem:[%s253 + $0x120] sm:$0xff]
        %v291 = vld [vmem:[%s253 + $0x128] sm:$0xff]
        %v292 = vld [vmem:[%s253 + $0x130] sm:$0xff]
        %v293 = vld [vmem:[%s253 + $0x138] sm:$0xff]
        %v294 = vld [vmem:[%s253 + $0x140] sm:$0xff]
        %v295 = vld [vmem:[%s253 + $0x148] sm:$0xff]
        %v296 = vld [vmem:[%s253 + $0x150] sm:$0xff]
        %v297 = vld [vmem:[%s253 + $0x158] sm:$0xff]
        %v298 = vld [vmem:[%s253 + $0x160] sm:$0xff]
        %v299 = vld [vmem:[%s253 + $0x168] sm:$0xff]
        %v300 = vld [vmem:[%s253 + $0x170] sm:$0xff]
        %v301 = vld [vmem:[%s253 + $0x178] sm:$0xff]
        %v302 = vld [vmem:[%s253 + $0x180] sm:$0xff]
        %v303 = vld [vmem:[%s253 + $0x188] sm:$0xff]
        %v304 = vld [vmem:[%s253 + $0x190] sm:$0xff]
        %v305 = vld [vmem:[%s253 + $0x198] sm:$0xff]
        %v306 = vld [vmem:[%s253 + $0x1a0] sm:$0xff]
        %v307 = vld [vmem:[%s253 + $0x1a8] sm:$0xff]
        %v308 = vld [vmem:[%s253 + $0x1b0] sm:$0xff]
        %v309 = vld [vmem:[%s253 + $0x1b8] sm:$0xff]
        %v310 = vld [vmem:[%s253 + $0x1c0] sm:$0xff]
        %v311 = vld [vmem:[%s253 + $0x1c8] sm:$0xff]
        %v312 = vld [vmem:[%s253 + $0x1d0] sm:$0xff]
        %v313 = vld [vmem:[%s253 + $0x1d8] sm:$0xff]
        %v314 = vld [vmem:[%s253 + $0x1e0] sm:$0xff]
        %v315 = vld [vmem:[%s253 + $0x1e8] sm:$0xff]
        %v316 = vld [vmem:[%s253 + $0x1f0] sm:$0xff]
        %v317 = vld [vmem:[%s253 + $0x1f8] sm:$0xff]
        %vm322 = vcmask 1040384
        %v323 = vrot.slane %v249, 7
        %v324 = vrot.slane %v250, 7
        %v325 = vrot.slane %v251, 7
        %v326 = vsel %vm322, %v323, %v325
        %v327 = vrot.slane %v252, 7
        %v328 = vsel %vm322, %v324, %v327
        %v333 = vsel %vm322, 0.0, %v323
        %v334 = vsel %vm322, 0.0, %v324
        %v335 = vld [vmem:[#allocation2] sm:$0xff]
        %v336 = vld [vmem:[#allocation2 + $0x8] sm:$0xff]
        %v337 = vld [vmem:[#allocation2 + $0x10] sm:$0xff]
        %v338 = vld [vmem:[#allocation2 + $0x18] sm:$0xff]
        %v339 = vld [vmem:[#allocation2 + $0x20] sm:$0xff]
        %v340 = vld [vmem:[#allocation2 + $0x28] sm:$0xff]
        %v341 = vld [vmem:[#allocation2 + $0x30] sm:$0xff]
        %v342 = vld [vmem:[#allocation2 + $0x38] sm:$0xff]
        %v343 = vld [vmem:[#allocation2 + $0x40] sm:$0xff]
        %v344 = vld [vmem:[#allocation2 + $0x48] sm:$0xff]
        %v345 = vld [vmem:[#allocation2 + $0x50] sm:$0xff]
        %v346 = vld [vmem:[#allocation2 + $0x58] sm:$0xff]
        %v347 = vld [vmem:[#allocation2 + $0x60] sm:$0xff]
        %v348 = vld [vmem:[#allocation2 + $0x68] sm:$0xff]
        %v349 = vld [vmem:[#allocation2 + $0x70] sm:$0xff]
        %v350 = vld [vmem:[#allocation2 + $0x78] sm:$0xff]
        %v351 = vld [vmem:[#allocation2 + $0x80] sm:$0xff]
        %v352 = vld [vmem:[#allocation2 + $0x88] sm:$0xff]
        %v353 = vld [vmem:[#allocation2 + $0x90] sm:$0xff]
        %v354 = vld [vmem:[#allocation2 + $0x98] sm:$0xff]
        %v355 = vld [vmem:[#allocation2 + $0xa0] sm:$0xff]
        %v356 = vld [vmem:[#allocation2 + $0xa8] sm:$0xff]
        %v357 = vld [vmem:[#allocation2 + $0xb0] sm:$0xff]
        %v358 = vld [vmem:[#allocation2 + $0xb8] sm:$0xff]
        %v359 = vld [vmem:[#allocation2 + $0xc0] sm:$0xff]
        %v360 = vld [vmem:[#allocation2 + $0xc8] sm:$0xff]
        %v361 = vld [vmem:[#allocation2 + $0xd0] sm:$0xff]
        %v362 = vld [vmem:[#allocation2 + $0xd8] sm:$0xff]
        %v363 = vld [vmem:[#allocation2 + $0xe0] sm:$0xff]
        %v364 = vld [vmem:[#allocation2 + $0xe8] sm:$0xff]
        %v365 = vld [vmem:[#allocation2 + $0xf0] sm:$0xff]
        %v366 = vld [vmem:[#allocation2 + $0xf8] sm:$0xff]
        %v367 = vld [vmem:[#allocation2 + $0x100] sm:$0xff]
        %v368 = vld [vmem:[#allocation2 + $0x108] sm:$0xff]
        %v369 = vld [vmem:[#allocation2 + $0x110] sm:$0xff]
        %v370 = vld [vmem:[#allocation2 + $0x118] sm:$0xff]
        %v371 = vld [vmem:[#allocation2 + $0x120] sm:$0xff]
        %v372 = vld [vmem:[#allocation2 + $0x128] sm:$0xff]
        %v373 = vld [vmem:[#allocation2 + $0x130] sm:$0xff]
        %v374 = vld [vmem:[#allocation2 + $0x138] sm:$0xff]
        %v375 = vld [vmem:[#allocation2 + $0x140] sm:$0xff]
        %v376 = vld [vmem:[#allocation2 + $0x148] sm:$0xff]
        %v377 = vld [vmem:[#allocation2 + $0x150] sm:$0xff]
        %v378 = vld [vmem:[#allocation2 + $0x158] sm:$0xff]
        %v379 = vld [vmem:[#allocation2 + $0x160] sm:$0xff]
        %v380 = vld [vmem:[#allocation2 + $0x168] sm:$0xff]
        %v381 = vld [vmem:[#allocation2 + $0x170] sm:$0xff]
        %v382 = vld [vmem:[#allocation2 + $0x178] sm:$0xff]
        %v383 = vld [vmem:[#allocation2 + $0x180] sm:$0xff]
        %v384 = vld [vmem:[#allocation2 + $0x188] sm:$0xff]
        %v385 = vld [vmem:[#allocation2 + $0x190] sm:$0xff]
        %v386 = vld [vmem:[#allocation2 + $0x198] sm:$0xff]
        %v387 = vld [vmem:[#allocation2 + $0x1a0] sm:$0xff]
        %v388 = vld [vmem:[#allocation2 + $0x1a8] sm:$0xff]
        %v389 = vld [vmem:[#allocation2 + $0x1b0] sm:$0xff]
        %v390 = vld [vmem:[#allocation2 + $0x1b8] sm:$0xff]
        %v391 = vld [vmem:[#allocation2 + $0x1c0] sm:$0xff]
        %v392 = vld [vmem:[#allocation2 + $0x1c8] sm:$0xff]
        %v393 = vld [vmem:[#allocation2 + $0x1d0] sm:$0xff]
        %v394 = vld [vmem:[#allocation2 + $0x1d8] sm:$0xff]
        %v395 = vld [vmem:[#allocation2 + $0x1e0] sm:$0xff]
        %v396 = vld [vmem:[#allocation2 + $0x1e8] sm:$0xff]
        %v397 = vld [vmem:[#allocation2 + $0x1f0] sm:$0xff]
        %v398 = vld [vmem:[#allocation2 + $0x1f8] sm:$0xff]
        %399 = vmatprep.subr.mxu0 %v336
        %400 = vmatpush1.msra.mxu0 %v335
        %401 = vmatprep.subr.mxu0 %v338
        %402 = vmatpush1.msra.mxu0 %v337
        %403 = vmatprep.subr.mxu0 %v340
        %404 = vmatpush1.msra.mxu0 %v339
        %405 = vmatprep.subr.mxu0 %v342
        %406 = vmatpush1.msra.mxu0 %v341
        %407 = vmatprep.subr.mxu0 %v344
        %408 = vmatpush1.msra.mxu0 %v343
        %409 = vmatprep.subr.mxu0 %v346
        %410 = vmatpush1.msra.mxu0 %v345
        %411 = vmatprep.subr.mxu0 %v348
        %412 = vmatpush1.msra.mxu0 %v347
        %413 = vmatprep.subr.mxu0 %v350
        %414 = vmatpush1.msra.mxu0 %v349
        %415 = vmatprep.subr.mxu0 %v352
        %416 = vmatpush1.msra.mxu0 %v351
        %417 = vmatprep.subr.mxu0 %v354
        %418 = vmatpush1.msra.mxu0 %v353
        %419 = vmatprep.subr.mxu0 %v356
        %420 = vmatpush1.msra.mxu0 %v355
        %421 = vmatprep.subr.mxu0 %v358
        %422 = vmatpush1.msra.mxu0 %v357
        %423 = vmatprep.subr.mxu0 %v360
        %424 = vmatpush1.msra.mxu0 %v359
        %425 = vmatprep.subr.mxu0 %v362
        %426 = vmatpush1.msra.mxu0 %v361
        %427 = vmatprep.subr.mxu0 %v364
        %428 = vmatpush1.msra.mxu0 %v363
        %429 = vmatprep.subr.mxu0 %v366
        %430 = vmatpush1.msra.mxu0 %v365
        %431 = vmatprep.subr.mxu0 %v368
        %432 = vmatpush1.msra.mxu0 %v367
        %433 = vmatprep.subr.mxu0 %v370
        %434 = vmatpush1.msra.mxu0 %v369
        %435 = vmatprep.subr.mxu0 %v372
        %436 = vmatpush1.msra.mxu0 %v371
        %437 = vmatprep.subr.mxu0 %v374
        %438 = vmatpush1.msra.mxu0 %v373
        %439 = vmatprep.subr.mxu0 %v376
        %440 = vmatpush1.msra.mxu0 %v375
        %441 = vmatprep.subr.mxu0 %v378
        %442 = vmatpush1.msra.mxu0 %v377
        %443 = vmatprep.subr.mxu0 %v380
        %444 = vmatpush1.msra.mxu0 %v379
        %445 = vmatprep.subr.mxu0 %v382
        %446 = vmatpush1.msra.mxu0 %v381
        %447 = vmatprep.subr.mxu0 %v384
        %448 = vmatpush1.msra.mxu0 %v383
        %449 = vmatprep.subr.mxu0 %v386
        %450 = vmatpush1.msra.mxu0 %v385
        %451 = vmatprep.subr.mxu0 %v388
        %452 = vmatpush1.msra.mxu0 %v387
        %453 = vmatprep.subr.mxu0 %v390
        %454 = vmatpush1.msra.mxu0 %v389
        %455 = vmatprep.subr.mxu0 %v392
        %456 = vmatpush1.msra.mxu0 %v391
        %457 = vmatprep.subr.mxu0 %v394
        %458 = vmatpush1.msra.mxu0 %v393
        %459 = vmatprep.subr.mxu0 %v396
        %460 = vmatpush1.msra.mxu0 %v395
        %461 = vmatprep.subr.mxu0 %v398
        %462 = vmatpush1.msra.mxu0 %v397
        %463 = vmatprep.mubr.f32.mxu0 %v334
        %464 = vmatmul.mubr.f32.gmra.mrb[0].mxu0 %v333
        %v465 = vpop.f32.mrb[0].mxu0
        %v466 = vadd.f32 0.0, %v465
        %v467 = vpop.f32.mrb[0].mxu0
        %v468 = vadd.f32 0.0, %v467
        %469 = vmatprep.mubr.f32.mxu0 %v328
        %470 = vmatmul.mubr.f32.gmra.mrb[0].mxu0 %v326
        %v471 = vpop.f32.mrb[0].mxu0
        %v472 = vadd.f32 0.0, %v471
        %v473 = vpop.f32.mrb[0].mxu0
        %v474 = vadd.f32 0.0, %v473
        %475 = vdwg.mxu0
        %476 = vmatprep.subr.mxu0 %v255
        %477 = vmatpush1.msra.mxu0 %v254
        %478 = vmatprep.subr.mxu0 %v257
        %479 = vmatpush1.msra.mxu0 %v256
        %480 = vmatprep.subr.mxu0 %v259
        %481 = vmatpush1.msra.mxu0 %v258
        %482 = vmatprep.subr.mxu0 %v261
        %483 = vmatpush1.msra.mxu0 %v260
        %484 = vmatprep.subr.mxu0 %v263
        %485 = vmatpush1.msra.mxu0 %v262
        %486 = vmatprep.subr.mxu0 %v265
        %487 = vmatpush1.msra.mxu0 %v264
        %488 = vmatprep.subr.mxu0 %v267
        %489 = vmatpush1.msra.mxu0 %v266
        %490 = vmatprep.subr.mxu0 %v269
        %491 = vmatpush1.msra.mxu0 %v268
        %492 = vmatprep.subr.mxu0 %v271
        %493 = vmatpush1.msra.mxu0 %v270
        %494 = vmatprep.subr.mxu0 %v273
        %495 = vmatpush1.msra.mxu0 %v272
        %496 = vmatprep.subr.mxu0 %v275
        %497 = vmatpush1.msra.mxu0 %v274
        %498 = vmatprep.subr.mxu0 %v277
        %499 = vmatpush1.msra.mxu0 %v276
        %500 = vmatprep.subr.mxu0 %v279
        %501 = vmatpush1.msra.mxu0 %v278
        %502 = vmatprep.subr.mxu0 %v281
        %503 = vmatpush1.msra.mxu0 %v280
        %504 = vmatprep.subr.mxu0 %v283
        %505 = vmatpush1.msra.mxu0 %v282
        %506 = vmatprep.subr.mxu0 %v285
        %507 = vmatpush1.msra.mxu0 %v284
        %508 = vmatprep.subr.mxu0 %v287
        %509 = vmatpush1.msra.mxu0 %v286
        %510 = vmatprep.subr.mxu0 %v289
        %511 = vmatpush1.msra.mxu0 %v288
        %512 = vmatprep.subr.mxu0 %v291
        %513 = vmatpush1.msra.mxu0 %v290
        %514 = vmatprep.subr.mxu0 %v293
        %515 = vmatpush1.msra.mxu0 %v292
        %516 = vmatprep.subr.mxu0 %v295
        %517 = vmatpush1.msra.mxu0 %v294
        %518 = vmatprep.subr.mxu0 %v297
        %519 = vmatpush1.msra.mxu0 %v296
        %520 = vmatprep.subr.mxu0 %v299
        %521 = vmatpush1.msra.mxu0 %v298
        %522 = vmatprep.subr.mxu0 %v301
        %523 = vmatpush1.msra.mxu0 %v300
        %524 = vmatprep.subr.mxu0 %v303
        %525 = vmatpush1.msra.mxu0 %v302
        %526 = vmatprep.subr.mxu0 %v305
        %527 = vmatpush1.msra.mxu0 %v304
        %528 = vmatprep.subr.mxu0 %v307
        %529 = vmatpush1.msra.mxu0 %v306
        %530 = vmatprep.subr.mxu0 %v309
        %531 = vmatpush1.msra.mxu0 %v308
        %532 = vmatprep.subr.mxu0 %v311
        %533 = vmatpush1.msra.mxu0 %v310
        %534 = vmatprep.subr.mxu0 %v313
        %535 = vmatpush1.msra.mxu0 %v312
        %536 = vmatprep.subr.mxu0 %v315
        %537 = vmatpush1.msra.mxu0 %v314
        %538 = vmatprep.subr.mxu0 %v317
        %539 = vmatpush1.msra.mxu0 %v316
        %540 = vmatprep.mubr.f32.mxu0 %v250
        %541 = vmatmul.mubr.f32.gmra.mrb[0].mxu0 %v249
        %v542 = vpop.f32.mrb[0].mxu0
        %v543 = vadd.f32 %v466, %v542
        %v544 = vpop.f32.mrb[0].mxu0
        %v545 = vadd.f32 %v468, %v544
        %546 = vmatprep.mubr.f32.mxu0 %v252
        %547 = vmatmul.mubr.f32.gmra.mrb[0].mxu0 %v251
        %v548 = vpop.f32.mrb[0].mxu0
        %v549 = vadd.f32 %v472, %v548
        %v550 = vpop.f32.mrb[0].mxu0
        %v551 = vadd.f32 %v474, %v550
        %552 = vdwg.mxu0
        %vm553 = vcmask 1046528
        %v554 = vrot.slane %v249, 1
        %v555 = vrot.slane %v251, 1
        %v556 = vsel %vm553, %v554, %v555
        %v557 = vrot.slane %v250, 1
        %v558 = vrot.slane %v252, 1
        %v559 = vsel %vm553, %v557, %v558
        %v564 = vsel %vm553, %v555, 0.0
        %v565 = vsel %vm553, %v558, 0.0
        %s566 = scalar_lea.vmem [#allocation2], 1024
        %v567 = vld [vmem:[%s566] sm:$0xff]
        %v568 = vld [vmem:[%s566 + $0x8] sm:$0xff]
        %v569 = vld [vmem:[%s566 + $0x10] sm:$0xff]
        %v570 = vld [vmem:[%s566 + $0x18] sm:$0xff]
        %v571 = vld [vmem:[%s566 + $0x20] sm:$0xff]
        %v572 = vld [vmem:[%s566 + $0x28] sm:$0xff]
        %v573 = vld [vmem:[%s566 + $0x30] sm:$0xff]
        %v574 = vld [vmem:[%s566 + $0x38] sm:$0xff]
        %v575 = vld [vmem:[%s566 + $0x40] sm:$0xff]
        %v576 = vld [vmem:[%s566 + $0x48] sm:$0xff]
        %v577 = vld [vmem:[%s566 + $0x50] sm:$0xff]
        %v578 = vld [vmem:[%s566 + $0x58] sm:$0xff]
        %v579 = vld [vmem:[%s566 + $0x60] sm:$0xff]
        %v580 = vld [vmem:[%s566 + $0x68] sm:$0xff]
        %v581 = vld [vmem:[%s566 + $0x70] sm:$0xff]
        %v582 = vld [vmem:[%s566 + $0x78] sm:$0xff]
        %v583 = vld [vmem:[%s566 + $0x80] sm:$0xff]
        %v584 = vld [vmem:[%s566 + $0x88] sm:$0xff]
        %v585 = vld [vmem:[%s566 + $0x90] sm:$0xff]
        %v586 = vld [vmem:[%s566 + $0x98] sm:$0xff]
        %v587 = vld [vmem:[%s566 + $0xa0] sm:$0xff]
        %v588 = vld [vmem:[%s566 + $0xa8] sm:$0xff]
        %v589 = vld [vmem:[%s566 + $0xb0] sm:$0xff]
        %v590 = vld [vmem:[%s566 + $0xb8] sm:$0xff]
        %v591 = vld [vmem:[%s566 + $0xc0] sm:$0xff]
        %v592 = vld [vmem:[%s566 + $0xc8] sm:$0xff]
        %v593 = vld [vmem:[%s566 + $0xd0] sm:$0xff]
        %v594 = vld [vmem:[%s566 + $0xd8] sm:$0xff]
        %v595 = vld [vmem:[%s566 + $0xe0] sm:$0xff]
        %v596 = vld [vmem:[%s566 + $0xe8] sm:$0xff]
        %v597 = vld [vmem:[%s566 + $0xf0] sm:$0xff]
        %v598 = vld [vmem:[%s566 + $0xf8] sm:$0xff]
        %v599 = vld [vmem:[%s566 + $0x100] sm:$0xff]
        %v600 = vld [vmem:[%s566 + $0x108] sm:$0xff]
        %v601 = vld [vmem:[%s566 + $0x110] sm:$0xff]
        %v602 = vld [vmem:[%s566 + $0x118] sm:$0xff]
        %v603 = vld [vmem:[%s566 + $0x120] sm:$0xff]
        %v604 = vld [vmem:[%s566 + $0x128] sm:$0xff]
        %v605 = vld [vmem:[%s566 + $0x130] sm:$0xff]
        %v606 = vld [vmem:[%s566 + $0x138] sm:$0xff]
        %v607 = vld [vmem:[%s566 + $0x140] sm:$0xff]
        %v608 = vld [vmem:[%s566 + $0x148] sm:$0xff]
        %v609 = vld [vmem:[%s566 + $0x150] sm:$0xff]
        %v610 = vld [vmem:[%s566 + $0x158] sm:$0xff]
        %v611 = vld [vmem:[%s566 + $0x160] sm:$0xff]
        %v612 = vld [vmem:[%s566 + $0x168] sm:$0xff]
        %v613 = vld [vmem:[%s566 + $0x170] sm:$0xff]
        %v614 = vld [vmem:[%s566 + $0x178] sm:$0xff]
        %v615 = vld [vmem:[%s566 + $0x180] sm:$0xff]
        %v616 = vld [vmem:[%s566 + $0x188] sm:$0xff]
        %v617 = vld [vmem:[%s566 + $0x190] sm:$0xff]
        %v618 = vld [vmem:[%s566 + $0x198] sm:$0xff]
        %v619 = vld [vmem:[%s566 + $0x1a0] sm:$0xff]
        %v620 = vld [vmem:[%s566 + $0x1a8] sm:$0xff]
        %v621 = vld [vmem:[%s566 + $0x1b0] sm:$0xff]
        %v622 = vld [vmem:[%s566 + $0x1b8] sm:$0xff]
        %v623 = vld [vmem:[%s566 + $0x1c0] sm:$0xff]
        %v624 = vld [vmem:[%s566 + $0x1c8] sm:$0xff]
        %v625 = vld [vmem:[%s566 + $0x1d0] sm:$0xff]
        %v626 = vld [vmem:[%s566 + $0x1d8] sm:$0xff]
        %v627 = vld [vmem:[%s566 + $0x1e0] sm:$0xff]
        %v628 = vld [vmem:[%s566 + $0x1e8] sm:$0xff]
        %v629 = vld [vmem:[%s566 + $0x1f0] sm:$0xff]
        %v630 = vld [vmem:[%s566 + $0x1f8] sm:$0xff]
        %631 = vmatprep.subr.mxu0 %v568
        %632 = vmatpush1.msra.mxu0 %v567
        %633 = vmatprep.subr.mxu0 %v570
        %634 = vmatpush1.msra.mxu0 %v569
        %635 = vmatprep.subr.mxu0 %v572
        %636 = vmatpush1.msra.mxu0 %v571
        %637 = vmatprep.subr.mxu0 %v574
        %638 = vmatpush1.msra.mxu0 %v573
        %639 = vmatprep.subr.mxu0 %v576
        %640 = vmatpush1.msra.mxu0 %v575
        %641 = vmatprep.subr.mxu0 %v578
        %642 = vmatpush1.msra.mxu0 %v577
        %643 = vmatprep.subr.mxu0 %v580
        %644 = vmatpush1.msra.mxu0 %v579
        %645 = vmatprep.subr.mxu0 %v582
        %646 = vmatpush1.msra.mxu0 %v581
        %647 = vmatprep.subr.mxu0 %v584
        %648 = vmatpush1.msra.mxu0 %v583
        %649 = vmatprep.subr.mxu0 %v586
        %650 = vmatpush1.msra.mxu0 %v585
        %651 = vmatprep.subr.mxu0 %v588
        %652 = vmatpush1.msra.mxu0 %v587
        %653 = vmatprep.subr.mxu0 %v590
        %654 = vmatpush1.msra.mxu0 %v589
        %655 = vmatprep.subr.mxu0 %v592
        %656 = vmatpush1.msra.mxu0 %v591
        %657 = vmatprep.subr.mxu0 %v594
        %658 = vmatpush1.msra.mxu0 %v593
        %659 = vmatprep.subr.mxu0 %v596
        %660 = vmatpush1.msra.mxu0 %v595
        %661 = vmatprep.subr.mxu0 %v598
        %662 = vmatpush1.msra.mxu0 %v597
        %663 = vmatprep.subr.mxu0 %v600
        %664 = vmatpush1.msra.mxu0 %v599
        %665 = vmatprep.subr.mxu0 %v602
        %666 = vmatpush1.msra.mxu0 %v601
        %667 = vmatprep.subr.mxu0 %v604
        %668 = vmatpush1.msra.mxu0 %v603
        %669 = vmatprep.subr.mxu0 %v606
        %670 = vmatpush1.msra.mxu0 %v605
        %671 = vmatprep.subr.mxu0 %v608
        %672 = vmatpush1.msra.mxu0 %v607
        %673 = vmatprep.subr.mxu0 %v610
        %674 = vmatpush1.msra.mxu0 %v609
        %675 = vmatprep.subr.mxu0 %v612
        %676 = vmatpush1.msra.mxu0 %v611
        %677 = vmatprep.subr.mxu0 %v614
        %678 = vmatpush1.msra.mxu0 %v613
        %679 = vmatprep.subr.mxu0 %v616
        %680 = vmatpush1.msra.mxu0 %v615
        %681 = vmatprep.subr.mxu0 %v618
        %682 = vmatpush1.msra.mxu0 %v617
        %683 = vmatprep.subr.mxu0 %v620
        %684 = vmatpush1.msra.mxu0 %v619
        %685 = vmatprep.subr.mxu0 %v622
        %686 = vmatpush1.msra.mxu0 %v621
        %687 = vmatprep.subr.mxu0 %v624
        %688 = vmatpush1.msra.mxu0 %v623
        %689 = vmatprep.subr.mxu0 %v626
        %690 = vmatpush1.msra.mxu0 %v625
        %691 = vmatprep.subr.mxu0 %v628
        %692 = vmatpush1.msra.mxu0 %v627
        %693 = vmatprep.subr.mxu0 %v630
        %694 = vmatpush1.msra.mxu0 %v629
        %695 = vmatprep.mubr.f32.mxu0 %v559
        %696 = vmatmul.mubr.f32.gmra.mrb[0].mxu0 %v556
        %v697 = vpop.f32.mrb[0].mxu0
        %v698 = vadd.f32 0.0, %v697
        %v699 = vpop.f32.mrb[0].mxu0
        %v700 = vadd.f32 0.0, %v699
        %701 = vmatprep.mubr.f32.mxu0 %v565
        %702 = vmatmul.mubr.f32.gmra.mrb[0].mxu0 %v564
        %v703 = vpop.f32.mrb[0].mxu0
        %v704 = vadd.f32 0.0, %v703
        %v705 = vpop.f32.mrb[0].mxu0
        %v706 = vadd.f32 0.0, %v705
        %707 = vdwg.mxu0
        %v708 = vadd.f32 %v543, %v698
        %v709 = vadd.f32 %v545, %v700
        %v710 = vadd.f32 %v549, %v704
        %v711 = vadd.f32 %v551, %v706
        %v712 = vld [vmem:[%s3] sm:$0x3]
        %v714 = vlaneseq
        %v715 = vshrl.u32 %v714, 7
        %v716 = vsub.s32 0, %v715
        %v717 = vrot.slane %v712, %v716
        %v718 = vlaneseq
        %v719 = vshrl.u32 %v718, 7
        %v720 = vsub.s32 1, %v719
        %v721 = vrot.slane %v712, %v720
        %v724 = vadd.f32 %v708, %v717
        %v725 = vadd.f32 %v709, %v721
        %v726 = vadd.f32 %v710, %v717
        %v727 = vadd.f32 %v711, %v721
        %v728 = vmul.f32 %v724, 0.5
        %v729 = vmul.f32 %v725, 0.5
        %v730 = vmul.f32 %v726, 0.5
        %v731 = vmul.f32 %v727, 0.5
        %v732 = vmul.f32 %v724, 0.7978846
        %v733 = vmul.f32 %v725, 0.7978846
        %v734 = vmul.f32 %v726, 0.7978846
        %v735 = vmul.f32 %v727, 0.7978846
        %v736 = vmul.f32 %v724, 0.044715
        %v737 = vmul.f32 %v725, 0.044715
        %v738 = vmul.f32 %v726, 0.044715
        %v739 = vmul.f32 %v727, 0.044715
        %v740 = vmul.f32 %v736, %v724
        %v741 = vmul.f32 %v737, %v725
        %v742 = vmul.f32 %v738, %v726
        %v743 = vmul.f32 %v739, %v727
        %v744 = vadd.f32 %v740, 1.0
        %v745 = vadd.f32 %v741, 1.0
        %v746 = vadd.f32 %v742, 1.0
        %v747 = vadd.f32 %v743, 1.0
        %v748 = vmul.f32 %v732, %v744
        %v749 = vmul.f32 %v733, %v745
        %v750 = vmul.f32 %v734, %v746
        %v751 = vmul.f32 %v735, %v747
        %v752 = vtanh.pop %v748
        %v753 = vtanh.pop %v749
        %v754 = vtanh.pop %v750
        %v755 = vtanh.pop %v751
        %v756 = vadd.f32 %v752, 1.0
        %v757 = vadd.f32 %v753, 1.0
        %v758 = vadd.f32 %v754, 1.0
        %v759 = vadd.f32 %v755, 1.0
        %v760 = vmul.f32 %v728, %v756
        %v761 = vmul.f32 %v729, %v757
        %v762 = vmul.f32 %v730, %v758
        %v763 = vmul.f32 %v731, %v759
        %764 = vst [vmem:[%s232] sm:$0xff] %v760
        %765 = vst [vmem:[%s232 + $0x8] sm:$0xff] %v761
        %766 = vst [vmem:[%s232 + $0x10] sm:$0xff] %v762
        %767 = vst [vmem:[%s232 + $0x18] sm:$0xff] %v763
        %p768 = scmp.lt.s32.totalorder %s16, 1
        %s769 = scalar_select %p768, %s16, 1
        %s770 = smul.addr %s769, 4
        %s771 = smul.addr %s770, 8
        %s772 = scalar_lea.vmem %s4, %s771
        // Predicated region
        $region41: #{_lambda_.4} parent=35 // pred_check
          %p773 = pneg %p128
        $region42: #{_lambda_.4} parent=35 // pred_check_branch
          %775 = sbr.rel (%p773) target = $region44
        $region43: #{_lambda_.4} parent=35 // pred_region
          _
        $region44: #{_lambda_.4} parent=35 // pred_fallthru
          _
      $region36: #{_lambda_.4} parent=5 // pred_fallthru
        _
      %p776 = scmp.le.s32.totalorder 2, %s11
      // Predicated region
      $region45: #{_lambda_.4} parent=5 // pred_check
        %p777 = pneg %p776
      $region46: #{_lambda_.4} parent=5 // pred_check_branch
        %779 = sbr.rel (%p777) target = $region48
      $region47: #{_lambda_.4} parent=5 // pred_region
        %s780 = ssub.s32 %s11, 2
        // Predicated region
        $region49: #{_lambda_.4} parent=47 // pred_check
          %p781 = pneg %p134
        $region50: #{_lambda_.4} parent=47 // pred_check_branch
          %783 = sbr.rel (%p781) target = $region52
        $region51: #{_lambda_.4} parent=47 // pred_region
          %p784 = scmp.lt.s32.totalorder %s17, 1
          %s785 = scalar_select %p784, %s17, 1
          %s786 = smul.addr %s785, 4
          %s787 = smul.addr %s786, 8
          %s788 = scalar_lea.vmem %s4, %s787
        $region52: #{_lambda_.4} parent=47 // pred_fallthru
          _
      $region48: #{_lambda_.4} parent=5 // pred_fallthru
        _
    $region6: #{_lambda_.4} parent=1 // loop_footer
      %s15 = sadd.s32 1, %s11
    $region7: #{_lambda_.4} parent=1 // loop_footer_branch
      %10 = sbr.rel target = $region3
    $region8: #{_lambda_.4} parent=1 // loop_exit
      _
    %789 = vsyncpa [#allocation3], 1
    %s790 = scalar_lea.sflag [#allocation3], 1
    %791 = vsyncpa %s790, 1

</llo_original>
